<compile_context>
chip_gen: v7x
topology: tpu7x:2x2x1
jax: 0.10.0
libtpu: 0.0.40
codegen_flags: <defaults>
</compile_context>

<pallas_src>
import numpy as np
import jax
import jax.numpy as jnp
from jax.experimental import pallas as pl
from jax.experimental.pallas import tpu as pltpu


def _round_up(x, m):
    return (x + m - 1) // m * m


# ----------------------------------------------------------------------------
# Pallas kernel: one unidirectional LSTM "stream" over a full padded sequence.
# Input projection is hoisted out of the recurrence; h/c live in registers.
# ----------------------------------------------------------------------------
def _make_lstm_kernel(T, Bp, Hp):
    def kernel(x_ref, wih_ref, whh_ref, b_ref, out_ref, xg_scr):
        # x_ref:   [T*Bp, Dp]   bf16  time-major rows grouped by timestep
        # wih_ref: [Dp, 4Hp]    bf16  input->gates (pre-transposed, gate-padded)
        # whh_ref: [Hp, 4Hp]    bf16  hidden->gates
        # b_ref:   [1, 4Hp]     f32   b_ih + b_hh (gate-padded)
        # out_ref: [T*Bp, Hp]   f32   per-timestep hidden states
        # xg_scr:  [T*Bp, 4Hp]  f32   hoisted input projection

        # One large MXU matmul for the whole sequence + bias (off the serial path).
        xg_scr[...] = (
            jnp.dot(x_ref[...], wih_ref[...], preferred_element_type=jnp.float32)
            + b_ref[...])

        whh = whh_ref[...]

        def step(t, carry):
            h, c = carry
            row = pl.multiple_of(t * Bp, Bp)
            gates = xg_scr[pl.ds(row, Bp), :] + jnp.dot(
                h.astype(whh.dtype), whh, preferred_element_type=jnp.float32)
            # Gate order matches PyTorch: i, f, g, o (each a full 128-lane chunk).
            i = jax.nn.sigmoid(gates[:, 0 * Hp:1 * Hp])
            f = jax.nn.sigmoid(gates[:, 1 * Hp:2 * Hp])
            g = jnp.tanh(gates[:, 2 * Hp:3 * Hp])
            c_new = f * c + i * g
            tanh_c = jnp.tanh(c_new)
            o = jax.nn.sigmoid(gates[:, 3 * Hp:4 * Hp])
            h_new = o * tanh_c
            out_ref[pl.ds(row, Bp), :] = h_new
            return (h_new, c_new)

        h0 = jnp.zeros((Bp, Hp), jnp.float32)
        c0 = jnp.zeros((Bp, Hp), jnp.float32)
        jax.lax.fori_loop(0, T, step, (h0, c0), unroll=True)

    return kernel


def _fused_lstm_layer(x_stack, wih_stack, whh_stack, b_stack, T, Bp):
    """Run G independent LSTM streams (fwd/bwd x encoders) in one pallas_call.

    x_stack:   [G, T*Bp, Dp]  bf16
    wih_stack: [G, Dp, 4Hp]   bf16
    whh_stack: [G, Hp, 4Hp]   bf16
    b_stack:   [G, 1, 4Hp]    f32
    returns    [G, T*Bp, Hp]  f32
    """
    G, TB, Dp = x_stack.shape
    Hp4 = wih_stack.shape[-1]
    Hp = Hp4 // 4

    return pl.pallas_call(
        _make_lstm_kernel(T, Bp, Hp),
        out_shape=jax.ShapeDtypeStruct((G, TB, Hp), jnp.float32),
        grid=(G,),
        in_specs=[
            pl.BlockSpec((None, TB, Dp), lambda g: (g, 0, 0)),
            pl.BlockSpec((None, Dp, Hp4), lambda g: (g, 0, 0)),
            pl.BlockSpec((None, Hp, Hp4), lambda g: (g, 0, 0)),
            pl.BlockSpec((None, 1, Hp4), lambda g: (g, 0, 0)),
        ],
        out_specs=pl.BlockSpec((None, TB, Hp), lambda g: (g, 0, 0)),
        scratch_shapes=[pltpu.VMEM((TB, Hp4), jnp.float32)],
        compiler_params=pltpu.CompilerParams(
            dimension_semantics=("parallel",),
            vmem_limit_bytes=32 * 1024 * 1024),
    )(x_stack, wih_stack, whh_stack, b_stack)


# ----------------------------------------------------------------------------
# Parameter init / packing (transpose, gate-padding, bias fusion hoisted here)
# ----------------------------------------------------------------------------
def _pack_lstm_dir(w_ih, w_hh, b_ih, b_hh, Dp, Hp):
    """Pack PyTorch-layout LSTM params into padded, transposed kernel layout."""
    H4, D = w_ih.shape
    H = H4 // 4
    wih_p = jnp.zeros((Dp, 4 * Hp), jnp.float32)
    whh_p = jnp.zeros((Hp, 4 * Hp), jnp.float32)
    b_p = jnp.zeros((1, 4 * Hp), jnp.float32)
    b = b_ih + b_hh
    for g in range(4):
        wih_p = wih_p.at[:D, g * Hp:g * Hp + H].set(
            jnp.transpose(w_ih[g * H:(g + 1) * H, :]))
        whh_p = whh_p.at[:H, g * Hp:g * Hp + H].set(
            jnp.transpose(w_hh[g * H:(g + 1) * H, :]))
        b_p = b_p.at[0, g * Hp:g * Hp + H].set(b[g * H:(g + 1) * H])
    # bf16 matmul inputs (f32 accumulation in kernel); bias stays f32.
    return (wih_p.astype(jnp.bfloat16), whh_p.astype(jnp.bfloat16), b_p)


def init_bilstm_params(key, input_size, hidden, num_layers, Hp):
    """Deterministic PyTorch-style uniform(-1/sqrt(H), 1/sqrt(H)) init, packed."""
    params = []
    k = 1.0 / float(hidden) ** 0.5
    for layer in range(num_layers):
        in_dim = input_size if layer == 0 else 2 * hidden
        Dp = _round_up(in_dim, 128)
        layer_params = {}
        for dname in ("fwd", "bwd"):
            key, k1, k2, k3, k4 = jax.random.split(key, 5)
            w_ih = jax.random.uniform(k1, (4 * hidden, in_dim), jnp.float32, -k, k)
            w_hh = jax.random.uniform(k2, (4 * hidden, hidden), jnp.float32, -k, k)
            b_ih = jax.random.uniform(k3, (4 * hidden,), jnp.float32, -k, k)
            b_hh = jax.random.uniform(k4, (4 * hidden,), jnp.float32, -k, k)
            layer_params[dname] = _pack_lstm_dir(w_ih, w_hh, b_ih, b_hh, Dp, Hp)
        params.append(layer_params)
    return params, key


# ----------------------------------------------------------------------------
# Glue: fused multi-encoder bidirectional multi-layer LSTM
# ----------------------------------------------------------------------------
def _reverse_within_len(x_btd, lengths):
    """Reverse each sequence within its valid length (padding stays at end)."""
    B, T, _ = x_btd.shape
    idx = jnp.arange(T)[None, :]
    rev = jnp.where(idx < lengths[:, None], lengths[:, None] - 1 - idx, idx)
    return jnp.take_along_axis(x_btd, rev[:, :, None], axis=1)


def run_fused_bilstm(seq_list, len_list, params_list, hidden):
    """Run several bidirectional multi-layer LSTMs (== net_utils.run_lstm on
    padded batches), fused into one pallas_call per layer.

    seq_list:    list of [B_i, T_i, D] f32 (batch_first) padded inputs
    len_list:    list of [B_i] int32 valid lengths
    params_list: list (per encoder) of packed per-layer {'fwd','bwd'} params
    Returns list of [B_i, T_i, 2*hidden] with zeros at padded positions.
    """
    n_enc = len(seq_list)
    num_layers = len(params_list[0])
    Hp = params_list[0][0]["fwd"][1].shape[0]            # whh_p: [Hp, 4Hp]

    B_list = [int(s.shape[0]) for s in seq_list]
    T_list = [int(s.shape[1]) for s in seq_list]
    Tmax = max(T_list)
    Bp = _round_up(max(B_list), 8)

    masks = [
        (jnp.arange(T_list[e])[None, :] < len_list[e][:, None]
         ).astype(jnp.float32)[..., None]
        for e in range(n_enc)
    ]

    cur = list(seq_list)
    for layer in range(num_layers):
        D_real = int(cur[0].shape[-1])
        Dp = params_list[0][layer]["fwd"][0].shape[0]    # wih_p: [Dp, 4Hp]

        xs, wih_s, whh_s, b_s = [], [], [], []
        for e in range(n_enc):
            x = cur[e]                                   # [B_e, T_e, D_real]
            x_rev = _reverse_within_len(x, len_list[e])
            for xdir, dname in ((x, "fwd"), (x_rev, "bwd")):
                xp = jnp.zeros((Bp, Tmax, Dp), jnp.float32)
                xp = xp.at[:B_list[e], :T_list[e], :D_real].set(xdir)
                xs.append(jnp.transpose(xp, (1, 0, 2)).reshape(Tmax * Bp, Dp))
                w_ih_p, w_hh_p, b_p = params_list[e][layer][dname]
                wih_s.append(w_ih_p)
                whh_s.append(w_hh_p)
                b_s.append(b_p)

        x_stack = jnp.stack(xs).astype(jnp.bfloat16)     # [G, Tmax*Bp, Dp]
        wih_stack = jnp.stack(wih_s)                     # [G, Dp, 4Hp] bf16
        whh_stack = jnp.stack(whh_s)                     # [G, Hp, 4Hp] bf16
        b_stack = jnp.stack(b_s)                         # [G, 1, 4Hp]  f32

        out = _fused_lstm_layer(x_stack, wih_stack, whh_stack, b_stack, Tmax, Bp)
        out = out.reshape(len(xs), Tmax, Bp, Hp)         # [G, Tmax, Bp, Hp]

        new_cur = []
        for e in range(n_enc):
            Be, Te = B_list[e], T_list[e]
            of = jnp.transpose(out[2 * e], (1, 0, 2))[:Be, :Te, :hidden]
            ob_rev = jnp.transpose(out[2 * e + 1], (1, 0, 2))[:Be, :Te, :hidden]
            ob = _reverse_within_len(ob_rev, len_list[e])
            h_e = jnp.concatenate([of, ob], axis=-1) * masks[e]
            new_cur.append(h_e)
        cur = new_cur
        # TODO(synk): inter-layer dropout(0.3) omitted (eval-mode semantics).
    return cur


# ----------------------------------------------------------------------------
# BaselineEncoder forward
# ----------------------------------------------------------------------------
class EncoderOutput:
    def __init__(self, q_enc, q_len, col_enc, col_name_len, col_len):
        self.q_enc = q_enc
        self.q_len = q_len
        self.col_enc = col_enc
        self.col_name_len = col_name_len
        self.col_len = col_len


def baseline_encoder_forward(q_emb_var, q_len, col_emb_var, col_name_len,
                             col_len_np, q_params, col_params, hidden,
                             encode_cols=True):
    if not encode_cols:
        q_enc = run_fused_bilstm([q_emb_var], [q_len], [q_params], hidden)[0]
        return EncoderOutput(q_enc, q_len, None, None, None)

    # q encoder and col-name encoder fused into the same per-layer kernels.
    q_enc, name_hidden = run_fused_bilstm(
        [q_emb_var, col_emb_var], [q_len, col_name_len],
        [q_params, col_params], hidden)

    # col_name_encode: take output at last valid timestep of each column name,
    # then scatter per-batch according to col_len.
    total = name_hidden.shape[0]
    name_out = name_hidden[jnp.arange(total), col_name_len - 1]      # [N, 2H]

    B = len(col_len_np)
    max_col = int(np.max(col_len_np))
    starts = np.concatenate([[0], np.cumsum(col_len_np)[:-1]])
    col_enc = jnp.zeros((B, max_col, name_out.shape[-1]), jnp.float32)
    for b in range(B):                                   # static glue scatter
        cl = int(col_len_np[b])
        st = int(starts[b])
        col_enc = col_enc.at[b, :cl].set(name_out[st:st + cl])

    return EncoderOutput(q_enc, q_len, col_enc, col_name_len,
                         jnp.asarray(col_len_np, jnp.int32))


# ----------------------------------------------------------------------------
if __name__ == "__main__":
    # Small shapes implied by the module: N_word embedding dim, N_h hidden,
    # N_depth layers, bidirectional, batch_first.
    N_word, N_h, N_depth = 32, 32, 2
    H = N_h // 2              # per-direction hidden = 16
    HP = 128                  # lane-padded hidden per gate
    B, Tq = 2, 8

    key = jax.random.PRNGKey(0)

    # synthetic padded question embeddings (gen_x_q_batch output)
    q_len = jnp.asarray(np.array([8, 5], dtype=np.int32))
    key, sub = jax.random.split(key)
    q_emb = jax.random.normal(sub, (B, Tq, N_word), jnp.float32)
    q_mask = (np.arange(Tq)[None, :] < np.asarray(q_len)[:, None]).astype(np.float32)
    q_emb = q_emb * jnp.asarray(q_mask)[..., None]

    # synthetic padded column-name embeddings (gen_col_batch output)
    col_len_np = np.array([3, 4], dtype=np.int32)        # columns per example
    total_names = int(col_len_np.sum())
    Tc = 4
    col_name_len = jnp.asarray(np.array([2, 1, 3, 4, 2, 1, 2], dtype=np.int32))
    key, sub = jax.random.split(key)
    col_emb = jax.random.normal(sub, (total_names, Tc, N_word), jnp.float32)
    c_mask = (np.arange(Tc)[None, :] < np.asarray(col_name_len)[:, None]).astype(np.float32)
    col_emb = col_emb * jnp.asarray(c_mask)[..., None]

    # deterministic parameter init for q_lstm and col_lstm (packed at init)
    q_params, key = init_bilstm_params(key, N_word, H, N_depth, HP)
    col_params, key = init_bilstm_params(key, N_word, H, N_depth, HP)

    out = baseline_encoder_forward(q_emb, q_len, col_emb, col_name_len,
                                   col_len_np, q_params, col_params,
                                   hidden=H, encode_cols=True)

    jax.block_until_ready(out.q_enc)
    jax.block_until_ready(out.col_enc)

    assert out.q_enc.shape == (B, Tq, N_h)
    assert out.col_enc.shape == (B, int(col_len_np.max()), N_h)
    assert bool(jnp.all(jnp.isfinite(out.q_enc)))
    assert bool(jnp.all(jnp.isfinite(out.col_enc)))

    print("KERNEL_OK")
</pallas_src>

<mosaic_0001>
module attributes {stable_mosaic.version = 11 : i64} {
  func.func @kernel(%arg0: i32, %arg1: memref<1x64x128xbf16, #tpu.memory_space<vmem>>, %arg2: memref<1x128x512xbf16, #tpu.memory_space<vmem>>, %arg3: memref<1x128x512xbf16, #tpu.memory_space<vmem>>, %arg4: memref<1x1x512xf32, #tpu.memory_space<vmem>>, %arg5: memref<1x64x128xf32, #tpu.memory_space<vmem>>, %arg6: memref<64x512xf32, #tpu.memory_space<vmem>>) attributes {dimension_semantics = [#tpu.dimension_semantics<parallel>], iteration_bounds = array<i64: 4>, scalar_prefetch = 0 : i64, scratch_operands = 1 : i64, tpu.core_type = #tpu.core_type<tc>, window_params = [{transform_indices = @transform_0, window_bounds = array<i64: 1, 64, 128>}, {transform_indices = @transform_1, window_bounds = array<i64: 1, 128, 512>}, {transform_indices = @transform_2, window_bounds = array<i64: 1, 128, 512>}, {transform_indices = @transform_3, window_bounds = array<i64: 1, 1, 512>}, {transform_indices = @transform_4, window_bounds = array<i64: 1, 64, 128>}]} {
    %c0 = arith.constant 0 : index
    %c0_0 = arith.constant 0 : index
    %c0_1 = arith.constant 0 : index
    %0 = vector.load %arg1[%c0, %c0_0, %c0_1] : memref<1x64x128xbf16, #tpu.memory_space<vmem>>, vector<1x64x128xbf16>
    %1 = vector.shape_cast %0 : vector<1x64x128xbf16> to vector<64x128xbf16>
    %c0_2 = arith.constant 0 : index
    %c0_3 = arith.constant 0 : index
    %c0_4 = arith.constant 0 : index
    %2 = vector.load %arg2[%c0_2, %c0_3, %c0_4] : memref<1x128x512xbf16, #tpu.memory_space<vmem>>, vector<1x128x512xbf16>
    %3 = vector.shape_cast %2 : vector<1x128x512xbf16> to vector<128x512xbf16>
    %cst = arith.constant dense<0.000000e+00> : vector<64x512xf32>
    %4 = tpu.matmul %1, %3, %cst {dimension_numbers = #tpu.dot_dimension_numbers<[1], [0], [0], [1], [0, 0, 1, 1], [], []>} : vector<64x128xbf16>, vector<128x512xbf16>, vector<64x512xf32> -> vector<64x512xf32>
    %c0_5 = arith.constant 0 : index
    %c0_6 = arith.constant 0 : index
    %c0_7 = arith.constant 0 : index
    %5 = vector.load %arg4[%c0_5, %c0_6, %c0_7] : memref<1x1x512xf32, #tpu.memory_space<vmem>>, vector<1x1x512xf32>
    %6 = vector.shape_cast %5 : vector<1x1x512xf32> to vector<1x512xf32>
    %7 = vector.broadcast %6 : vector<1x512xf32> to vector<64x512xf32>
    %8 = arith.addf %4, %7 : vector<64x512xf32>
    %c0_8 = arith.constant 0 : index
    %c0_9 = arith.constant 0 : index
    %9 = vector.load %arg6[%c0_8, %c0_9] : memref<64x512xf32, #tpu.memory_space<vmem>>, vector<64x512xf32>
    tpu.vector_store %arg6[%c0_8, %c0_9], %8 {strides = array<i32>} : memref<64x512xf32, #tpu.memory_space<vmem>>, vector<64x512xf32>,
    %c0_10 = arith.constant 0 : index
    %c0_11 = arith.constant 0 : index
    %c0_12 = arith.constant 0 : index
    %10 = vector.load %arg3[%c0_10, %c0_11, %c0_12] : memref<1x128x512xbf16, #tpu.memory_space<vmem>>, vector<1x128x512xbf16>
    %11 = vector.shape_cast %10 : vector<1x128x512xbf16> to vector<128x512xbf16>
    %cst_13 = arith.constant 0.000000e+00 : f32
    %12 = vector.broadcast %cst_13 : f32 to vector<8x128xf32>
    %cst_14 = arith.constant 0.000000e+00 : f32
    %13 = vector.broadcast %cst_14 : f32 to vector<8x128xf32>
    %c0_i32 = arith.constant 0 : i32
    %c8_i32 = arith.constant 8 : i32
    %14 = arith.muli %c0_i32, %c8_i32 : i32
    %15 = tpu.assume_multiple %14, 8 : i32
    %16 = arith.index_cast %15 : i32 to index
    %c0_15 = arith.constant 0 : index
    %17 = vector.load %arg6[%16, %c0_15] : memref<64x512xf32, #tpu.memory_space<vmem>>, vector<8x512xf32>
    %18 = arith.truncf %12 : vector<8x128xf32> to vector<8x128xbf16>
    %cst_16 = arith.constant dense<0.000000e+00> : vector<8x512xf32>
    %19 = tpu.matmul %18, %11, %cst_16 {dimension_numbers = #tpu.dot_dimension_numbers<[1], [0], [0], [1], [0, 0, 1, 1], [], []>} : vector<8x128xbf16>, vector<128x512xbf16>, vector<8x512xf32> -> vector<8x512xf32>
    %20 = arith.addf %17, %19 : vector<8x512xf32>
    %21 = vector.extract_strided_slice %20 {offsets = [0, 0], sizes = [8, 128], strides = [1, 1]} : vector<8x512xf32> to vector<8x128xf32>
    %22 = arith.negf %21 : vector<8x128xf32>
    %23 = math.exp %22 : vector<8x128xf32>
    %cst_17 = arith.constant 1.000000e+00 : f32
    %24 = vector.broadcast %cst_17 : f32 to vector<8x128xf32>
    %25 = arith.addf %24, %23 : vector<8x128xf32>
    %26 = arith.divf %24, %25 : vector<8x128xf32>
    %27 = vector.extract_strided_slice %20 {offsets = [0, 128], sizes = [8, 128], strides = [1, 1]} : vector<8x512xf32> to vector<8x128xf32>
    %28 = arith.negf %27 : vector<8x128xf32>
    %29 = math.exp %28 : vector<8x128xf32>
    %cst_18 = arith.constant 1.000000e+00 : f32
    %30 = vector.broadcast %cst_18 : f32 to vector<8x128xf32>
    %31 = arith.addf %30, %29 : vector<8x128xf32>
    %32 = arith.divf %30, %31 : vector<8x128xf32>
    %33 = vector.extract_strided_slice %20 {offsets = [0, 256], sizes = [8, 128], strides = [1, 1]} : vector<8x512xf32> to vector<8x128xf32>
    %34 = math.tanh %33 : vector<8x128xf32>
    %35 = arith.mulf %32, %13 : vector<8x128xf32>
    %36 = arith.mulf %26, %34 : vector<8x128xf32>
    %37 = arith.addf %35, %36 : vector<8x128xf32>
    %38 = math.tanh %37 : vector<8x128xf32>
    %39 = vector.extract_strided_slice %20 {offsets = [0, 384], sizes = [8, 128], strides = [1, 1]} : vector<8x512xf32> to vector<8x128xf32>
    %40 = arith.negf %39 : vector<8x128xf32>
    %41 = math.exp %40 : vector<8x128xf32>
    %cst_19 = arith.constant 1.000000e+00 : f32
    %42 = vector.broadcast %cst_19 : f32 to vector<8x128xf32>
    %43 = arith.addf %42, %41 : vector<8x128xf32>
    %44 = arith.divf %42, %43 : vector<8x128xf32>
    %45 = arith.mulf %44, %38 : vector<8x128xf32>
    %c0_20 = arith.constant 0 : index
    %46 = arith.index_cast %15 : i32 to index
    %c0_21 = arith.constant 0 : index
    %47 = vector.load %arg5[%c0_20, %46, %c0_21] : memref<1x64x128xf32, #tpu.memory_space<vmem>>, vector<1x8x128xf32>
    %48 = vector.shape_cast %47 : vector<1x8x128xf32> to vector<8x128xf32>
    %49 = vector.shape_cast %45 : vector<8x128xf32> to vector<1x8x128xf32>
    tpu.vector_store %arg5[%c0_20, %46, %c0_21], %49 {strides = array<i32>} : memref<1x64x128xf32, #tpu.memory_space<vmem>>, vector<1x8x128xf32>,
    %c1_i32 = arith.constant 1 : i32
    %c8_i32_22 = arith.constant 8 : i32
    %50 = arith.muli %c1_i32, %c8_i32_22 : i32
    %51 = tpu.assume_multiple %50, 8 : i32
    %52 = arith.index_cast %51 : i32 to index
    %c0_23 = arith.constant 0 : index
    %53 = vector.load %arg6[%52, %c0_23] : memref<64x512xf32, #tpu.memory_space<vmem>>, vector<8x512xf32>
    %54 = arith.truncf %45 : vector<8x128xf32> to vector<8x128xbf16>
    %cst_24 = arith.constant dense<0.000000e+00> : vector<8x512xf32>
    %55 = tpu.matmul %54, %11, %cst_24 {dimension_numbers = #tpu.dot_dimension_numbers<[1], [0], [0], [1], [0, 0, 1, 1], [], []>} : vector<8x128xbf16>, vector<128x512xbf16>, vector<8x512xf32> -> vector<8x512xf32>
    %56 = arith.addf %53, %55 : vector<8x512xf32>
    %57 = vector.extract_strided_slice %56 {offsets = [0, 0], sizes = [8, 128], strides = [1, 1]} : vector<8x512xf32> to vector<8x128xf32>
    %58 = arith.negf %57 : vector<8x128xf32>
    %59 = math.exp %58 : vector<8x128xf32>
    %cst_25 = arith.constant 1.000000e+00 : f32
    %60 = vector.broadcast %cst_25 : f32 to vector<8x128xf32>
    %61 = arith.addf %60, %59 : vector<8x128xf32>
    %62 = arith.divf %60, %61 : vector<8x128xf32>
    %63 = vector.extract_strided_slice %56 {offsets = [0, 128], sizes = [8, 128], strides = [1, 1]} : vector<8x512xf32> to vector<8x128xf32>
    %64 = arith.negf %63 : vector<8x128xf32>
    %65 = math.exp %64 : vector<8x128xf32>
    %cst_26 = arith.constant 1.000000e+00 : f32
    %66 = vector.broadcast %cst_26 : f32 to vector<8x128xf32>
    %67 = arith.addf %66, %65 : vector<8x128xf32>
    %68 = arith.divf %66, %67 : vector<8x128xf32>
    %69 = vector.extract_strided_slice %56 {offsets = [0, 256], sizes = [8, 128], strides = [1, 1]} : vector<8x512xf32> to vector<8x128xf32>
    %70 = math.tanh %69 : vector<8x128xf32>
    %71 = arith.mulf %68, %37 : vector<8x128xf32>
    %72 = arith.mulf %62, %70 : vector<8x128xf32>
    %73 = arith.addf %71, %72 : vector<8x128xf32>
    %74 = math.tanh %73 : vector<8x128xf32>
    %75 = vector.extract_strided_slice %56 {offsets = [0, 384], sizes = [8, 128], strides = [1, 1]} : vector<8x512xf32> to vector<8x128xf32>
    %76 = arith.negf %75 : vector<8x128xf32>
    %77 = math.exp %76 : vector<8x128xf32>
    %cst_27 = arith.constant 1.000000e+00 : f32
    %78 = vector.broadcast %cst_27 : f32 to vector<8x128xf32>
    %79 = arith.addf %78, %77 : vector<8x128xf32>
    %80 = arith.divf %78, %79 : vector<8x128xf32>
    %81 = arith.mulf %80, %74 : vector<8x128xf32>
    %c0_28 = arith.constant 0 : index
    %82 = arith.index_cast %51 : i32 to index
    %c0_29 = arith.constant 0 : index
    %83 = vector.load %arg5[%c0_28, %82, %c0_29] : memref<1x64x128xf32, #tpu.memory_space<vmem>>, vector<1x8x128xf32>
    %84 = vector.shape_cast %83 : vector<1x8x128xf32> to vector<8x128xf32>
    %85 = vector.shape_cast %81 : vector<8x128xf32> to vector<1x8x128xf32>
    tpu.vector_store %arg5[%c0_28, %82, %c0_29], %85 {strides = array<i32>} : memref<1x64x128xf32, #tpu.memory_space<vmem>>, vector<1x8x128xf32>,
    %c2_i32 = arith.constant 2 : i32
    %c8_i32_30 = arith.constant 8 : i32
    %86 = arith.muli %c2_i32, %c8_i32_30 : i32
    %87 = tpu.assume_multiple %86, 8 : i32
    %88 = arith.index_cast %87 : i32 to index
    %c0_31 = arith.constant 0 : index
    %89 = vector.load %arg6[%88, %c0_31] : memref<64x512xf32, #tpu.memory_space<vmem>>, vector<8x512xf32>
    %90 = arith.truncf %81 : vector<8x128xf32> to vector<8x128xbf16>
    %cst_32 = arith.constant dense<0.000000e+00> : vector<8x512xf32>
    %91 = tpu.matmul %90, %11, %cst_32 {dimension_numbers = #tpu.dot_dimension_numbers<[1], [0], [0], [1], [0, 0, 1, 1], [], []>} : vector<8x128xbf16>, vector<128x512xbf16>, vector<8x512xf32> -> vector<8x512xf32>
    %92 = arith.addf %89, %91 : vector<8x512xf32>
    %93 = vector.extract_strided_slice %92 {offsets = [0, 0], sizes = [8, 128], strides = [1, 1]} : vector<8x512xf32> to vector<8x128xf32>
    %94 = arith.negf %93 : vector<8x128xf32>
    %95 = math.exp %94 : vector<8x128xf32>
    %cst_33 = arith.constant 1.000000e+00 : f32
    %96 = vector.broadcast %cst_33 : f32 to vector<8x128xf32>
    %97 = arith.addf %96, %95 : vector<8x128xf32>
    %98 = arith.divf %96, %97 : vector<8x128xf32>
    %99 = vector.extract_strided_slice %92 {offsets = [0, 128], sizes = [8, 128], strides = [1, 1]} : vector<8x512xf32> to vector<8x128xf32>
    %100 = arith.negf %99 : vector<8x128xf32>
    %101 = math.exp %100 : vector<8x128xf32>
    %cst_34 = arith.constant 1.000000e+00 : f32
    %102 = vector.broadcast %cst_34 : f32 to vector<8x128xf32>
    %103 = arith.addf %102, %101 : vector<8x128xf32>
    %104 = arith.divf %102, %103 : vector<8x128xf32>
    %105 = vector.extract_strided_slice %92 {offsets = [0, 256], sizes = [8, 128], strides = [1, 1]} : vector<8x512xf32> to vector<8x128xf32>
    %106 = math.tanh %105 : vector<8x128xf32>
    %107 = arith.mulf %104, %73 : vector<8x128xf32>
    %108 = arith.mulf %98, %106 : vector<8x128xf32>
    %109 = arith.addf %107, %108 : vector<8x128xf32>
    %110 = math.tanh %109 : vector<8x128xf32>
    %111 = vector.extract_strided_slice %92 {offsets = [0, 384], sizes = [8, 128], strides = [1, 1]} : vector<8x512xf32> to vector<8x128xf32>
    %112 = arith.negf %111 : vector<8x128xf32>
    %113 = math.exp %112 : vector<8x128xf32>
    %cst_35 = arith.constant 1.000000e+00 : f32
    %114 = vector.broadcast %cst_35 : f32 to vector<8x128xf32>
    %115 = arith.addf %114, %113 : vector<8x128xf32>
    %116 = arith.divf %114, %115 : vector<8x128xf32>
    %117 = arith.mulf %116, %110 : vector<8x128xf32>
    %c0_36 = arith.constant 0 : index
    %118 = arith.index_cast %87 : i32 to index
    %c0_37 = arith.constant 0 : index
    %119 = vector.load %arg5[%c0_36, %118, %c0_37] : memref<1x64x128xf32, #tpu.memory_space<vmem>>, vector<1x8x128xf32>
    %120 = vector.shape_cast %119 : vector<1x8x128xf32> to vector<8x128xf32>
    %121 = vector.shape_cast %117 : vector<8x128xf32> to vector<1x8x128xf32>
    tpu.vector_store %arg5[%c0_36, %118, %c0_37], %121 {strides = array<i32>} : memref<1x64x128xf32, #tpu.memory_space<vmem>>, vector<1x8x128xf32>,
    %c3_i32 = arith.constant 3 : i32
    %c8_i32_38 = arith.constant 8 : i32
    %122 = arith.muli %c3_i32, %c8_i32_38 : i32
    %123 = tpu.assume_multiple %122, 8 : i32
    %124 = arith.index_cast %123 : i32 to index
    %c0_39 = arith.constant 0 : index
    %125 = vector.load %arg6[%124, %c0_39] : memref<64x512xf32, #tpu.memory_space<vmem>>, vector<8x512xf32>
    %126 = arith.truncf %117 : vector<8x128xf32> to vector<8x128xbf16>
    %cst_40 = arith.constant dense<0.000000e+00> : vector<8x512xf32>
    %127 = tpu.matmul %126, %11, %cst_40 {dimension_numbers = #tpu.dot_dimension_numbers<[1], [0], [0], [1], [0, 0, 1, 1], [], []>} : vector<8x128xbf16>, vector<128x512xbf16>, vector<8x512xf32> -> vector<8x512xf32>
    %128 = arith.addf %125, %127 : vector<8x512xf32>
    %129 = vector.extract_strided_slice %128 {offsets = [0, 0], sizes = [8, 128], strides = [1, 1]} : vector<8x512xf32> to vector<8x128xf32>
    %130 = arith.negf %129 : vector<8x128xf32>
    %131 = math.exp %130 : vector<8x128xf32>
    %cst_41 = arith.constant 1.000000e+00 : f32
    %132 = vector.broadcast %cst_41 : f32 to vector<8x128xf32>
    %133 = arith.addf %132, %131 : vector<8x128xf32>
    %134 = arith.divf %132, %133 : vector<8x128xf32>
    %135 = vector.extract_strided_slice %128 {offsets = [0, 128], sizes = [8, 128], strides = [1, 1]} : vector<8x512xf32> to vector<8x128xf32>
    %136 = arith.negf %135 : vector<8x128xf32>
    %137 = math.exp %136 : vector<8x128xf32>
    %cst_42 = arith.constant 1.000000e+00 : f32
    %138 = vector.broadcast %cst_42 : f32 to vector<8x128xf32>
    %139 = arith.addf %138, %137 : vector<8x128xf32>
    %140 = arith.divf %138, %139 : vector<8x128xf32>
    %141 = vector.extract_strided_slice %128 {offsets = [0, 256], sizes = [8, 128], strides = [1, 1]} : vector<8x512xf32> to vector<8x128xf32>
    %142 = math.tanh %141 : vector<8x128xf32>
    %143 = arith.mulf %140, %109 : vector<8x128xf32>
    %144 = arith.mulf %134, %142 : vector<8x128xf32>
    %145 = arith.addf %143, %144 : vector<8x128xf32>
    %146 = math.tanh %145 : vector<8x128xf32>
    %147 = vector.extract_strided_slice %128 {offsets = [0, 384], sizes = [8, 128], strides = [1, 1]} : vector<8x512xf32> to vector<8x128xf32>
    %148 = arith.negf %147 : vector<8x128xf32>
    %149 = math.exp %148 : vector<8x128xf32>
    %cst_43 = arith.constant 1.000000e+00 : f32
    %150 = vector.broadcast %cst_43 : f32 to vector<8x128xf32>
    %151 = arith.addf %150, %149 : vector<8x128xf32>
    %152 = arith.divf %150, %151 : vector<8x128xf32>
    %153 = arith.mulf %152, %146 : vector<8x128xf32>
    %c0_44 = arith.constant 0 : index
    %154 = arith.index_cast %123 : i32 to index
    %c0_45 = arith.constant 0 : index
    %155 = vector.load %arg5[%c0_44, %154, %c0_45] : memref<1x64x128xf32, #tpu.memory_space<vmem>>, vector<1x8x128xf32>
    %156 = vector.shape_cast %155 : vector<1x8x128xf32> to vector<8x128xf32>
    %157 = vector.shape_cast %153 : vector<8x128xf32> to vector<1x8x128xf32>
    tpu.vector_store %arg5[%c0_44, %154, %c0_45], %157 {strides = array<i32>} : memref<1x64x128xf32, #tpu.memory_space<vmem>>, vector<1x8x128xf32>,
    %c4_i32 = arith.constant 4 : i32
    %c8_i32_46 = arith.constant 8 : i32
    %158 = arith.muli %c4_i32, %c8_i32_46 : i32
    %159 = tpu.assume_multiple %158, 8 : i32
    %160 = arith.index_cast %159 : i32 to index
    %c0_47 = arith.constant 0 : index
    %161 = vector.load %arg6[%160, %c0_47] : memref<64x512xf32, #tpu.memory_space<vmem>>, vector<8x512xf32>
    %162 = arith.truncf %153 : vector<8x128xf32> to vector<8x128xbf16>
    %cst_48 = arith.constant dense<0.000000e+00> : vector<8x512xf32>
    %163 = tpu.matmul %162, %11, %cst_48 {dimension_numbers = #tpu.dot_dimension_numbers<[1], [0], [0], [1], [0, 0, 1, 1], [], []>} : vector<8x128xbf16>, vector<128x512xbf16>, vector<8x512xf32> -> vector<8x512xf32>
    %164 = arith.addf %161, %163 : vector<8x512xf32>
    %165 = vector.extract_strided_slice %164 {offsets = [0, 0], sizes = [8, 128], strides = [1, 1]} : vector<8x512xf32> to vector<8x128xf32>
    %166 = arith.negf %165 : vector<8x128xf32>
    %167 = math.exp %166 : vector<8x128xf32>
    %cst_49 = arith.constant 1.000000e+00 : f32
    %168 = vector.broadcast %cst_49 : f32 to vector<8x128xf32>
    %169 = arith.addf %168, %167 : vector<8x128xf32>
    %170 = arith.divf %168, %169 : vector<8x128xf32>
    %171 = vector.extract_strided_slice %164 {offsets = [0, 128], sizes = [8, 128], strides = [1, 1]} : vector<8x512xf32> to vector<8x128xf32>
    %172 = arith.negf %171 : vector<8x128xf32>
    %173 = math.exp %172 : vector<8x128xf32>
    %cst_50 = arith.constant 1.000000e+00 : f32
    %174 = vector.broadcast %cst_50 : f32 to vector<8x128xf32>
    %175 = arith.addf %174, %173 : vector<8x128xf32>
    %176 = arith.divf %174, %175 : vector<8x128xf32>
    %177 = vector.extract_strided_slice %164 {offsets = [0, 256], sizes = [8, 128], strides = [1, 1]} : vector<8x512xf32> to vector<8x128xf32>
    %178 = math.tanh %177 : vector<8x128xf32>
    %179 = arith.mulf %176, %145 : vector<8x128xf32>
    %180 = arith.mulf %170, %178 : vector<8x128xf32>
    %181 = arith.addf %179, %180 : vector<8x128xf32>
    %182 = math.tanh %181 : vector<8x128xf32>
    %183 = vector.extract_strided_slice %164 {offsets = [0, 384], sizes = [8, 128], strides = [1, 1]} : vector<8x512xf32> to vector<8x128xf32>
    %184 = arith.negf %183 : vector<8x128xf32>
    %185 = math.exp %184 : vector<8x128xf32>
    %cst_51 = arith.constant 1.000000e+00 : f32
    %186 = vector.broadcast %cst_51 : f32 to vector<8x128xf32>
    %187 = arith.addf %186, %185 : vector<8x128xf32>
    %188 = arith.divf %186, %187 : vector<8x128xf32>
    %189 = arith.mulf %188, %182 : vector<8x128xf32>
    %c0_52 = arith.constant 0 : index
    %190 = arith.index_cast %159 : i32 to index
    %c0_53 = arith.constant 0 : index
    %191 = vector.load %arg5[%c0_52, %190, %c0_53] : memref<1x64x128xf32, #tpu.memory_space<vmem>>, vector<1x8x128xf32>
    %192 = vector.shape_cast %191 : vector<1x8x128xf32> to vector<8x128xf32>
    %193 = vector.shape_cast %189 : vector<8x128xf32> to vector<1x8x128xf32>
    tpu.vector_store %arg5[%c0_52, %190, %c0_53], %193 {strides = array<i32>} : memref<1x64x128xf32, #tpu.memory_space<vmem>>, vector<1x8x128xf32>,
    %c5_i32 = arith.constant 5 : i32
    %c8_i32_54 = arith.constant 8 : i32
    %194 = arith.muli %c5_i32, %c8_i32_54 : i32
    %195 = tpu.assume_multiple %194, 8 : i32
    %196 = arith.index_cast %195 : i32 to index
    %c0_55 = arith.constant 0 : index
    %197 = vector.load %arg6[%196, %c0_55] : memref<64x512xf32, #tpu.memory_space<vmem>>, vector<8x512xf32>
    %198 = arith.truncf %189 : vector<8x128xf32> to vector<8x128xbf16>
    %cst_56 = arith.constant dense<0.000000e+00> : vector<8x512xf32>
    %199 = tpu.matmul %198, %11, %cst_56 {dimension_numbers = #tpu.dot_dimension_numbers<[1], [0], [0], [1], [0, 0, 1, 1], [], []>} : vector<8x128xbf16>, vector<128x512xbf16>, vector<8x512xf32> -> vector<8x512xf32>
    %200 = arith.addf %197, %199 : vector<8x512xf32>
    %201 = vector.extract_strided_slice %200 {offsets = [0, 0], sizes = [8, 128], strides = [1, 1]} : vector<8x512xf32> to vector<8x128xf32>
    %202 = arith.negf %201 : vector<8x128xf32>
    %203 = math.exp %202 : vector<8x128xf32>
    %cst_57 = arith.constant 1.000000e+00 : f32
    %204 = vector.broadcast %cst_57 : f32 to vector<8x128xf32>
    %205 = arith.addf %204, %203 : vector<8x128xf32>
    %206 = arith.divf %204, %205 : vector<8x128xf32>
    %207 = vector.extract_strided_slice %200 {offsets = [0, 128], sizes = [8, 128], strides = [1, 1]} : vector<8x512xf32> to vector<8x128xf32>
    %208 = arith.negf %207 : vector<8x128xf32>
    %209 = math.exp %208 : vector<8x128xf32>
    %cst_58 = arith.constant 1.000000e+00 : f32
    %210 = vector.broadcast %cst_58 : f32 to vector<8x128xf32>
    %211 = arith.addf %210, %209 : vector<8x128xf32>
    %212 = arith.divf %210, %211 : vector<8x128xf32>
    %213 = vector.extract_strided_slice %200 {offsets = [0, 256], sizes = [8, 128], strides = [1, 1]} : vector<8x512xf32> to vector<8x128xf32>
    %214 = math.tanh %213 : vector<8x128xf32>
    %215 = arith.mulf %212, %181 : vector<8x128xf32>
    %216 = arith.mulf %206, %214 : vector<8x128xf32>
    %217 = arith.addf %215, %216 : vector<8x128xf32>
    %218 = math.tanh %217 : vector<8x128xf32>
    %219 = vector.extract_strided_slice %200 {offsets = [0, 384], sizes = [8, 128], strides = [1, 1]} : vector<8x512xf32> to vector<8x128xf32>
    %220 = arith.negf %219 : vector<8x128xf32>
    %221 = math.exp %220 : vector<8x128xf32>
    %cst_59 = arith.constant 1.000000e+00 : f32
    %222 = vector.broadcast %cst_59 : f32 to vector<8x128xf32>
    %223 = arith.addf %222, %221 : vector<8x128xf32>
    %224 = arith.divf %222, %223 : vector<8x128xf32>
    %225 = arith.mulf %224, %218 : vector<8x128xf32>
    %c0_60 = arith.constant 0 : index
    %226 = arith.index_cast %195 : i32 to index
    %c0_61 = arith.constant 0 : index
    %227 = vector.load %arg5[%c0_60, %226, %c0_61] : memref<1x64x128xf32, #tpu.memory_space<vmem>>, vector<1x8x128xf32>
    %228 = vector.shape_cast %227 : vector<1x8x128xf32> to vector<8x128xf32>
    %229 = vector.shape_cast %225 : vector<8x128xf32> to vector<1x8x128xf32>
    tpu.vector_store %arg5[%c0_60, %226, %c0_61], %229 {strides = array<i32>} : memref<1x64x128xf32, #tpu.memory_space<vmem>>, vector<1x8x128xf32>,
    %c6_i32 = arith.constant 6 : i32
    %c8_i32_62 = arith.constant 8 : i32
    %230 = arith.muli %c6_i32, %c8_i32_62 : i32
    %231 = tpu.assume_multiple %230, 8 : i32
    %232 = arith.index_cast %231 : i32 to index
    %c0_63 = arith.constant 0 : index
    %233 = vector.load %arg6[%232, %c0_63] : memref<64x512xf32, #tpu.memory_space<vmem>>, vector<8x512xf32>
    %234 = arith.truncf %225 : vector<8x128xf32> to vector<8x128xbf16>
    %cst_64 = arith.constant dense<0.000000e+00> : vector<8x512xf32>
    %235 = tpu.matmul %234, %11, %cst_64 {dimension_numbers = #tpu.dot_dimension_numbers<[1], [0], [0], [1], [0, 0, 1, 1], [], []>} : vector<8x128xbf16>, vector<128x512xbf16>, vector<8x512xf32> -> vector<8x512xf32>
    %236 = arith.addf %233, %235 : vector<8x512xf32>
    %237 = vector.extract_strided_slice %236 {offsets = [0, 0], sizes = [8, 128], strides = [1, 1]} : vector<8x512xf32> to vector<8x128xf32>
    %238 = arith.negf %237 : vector<8x128xf32>
    %239 = math.exp %238 : vector<8x128xf32>
    %cst_65 = arith.constant 1.000000e+00 : f32
    %240 = vector.broadcast %cst_65 : f32 to vector<8x128xf32>
    %241 = arith.addf %240, %239 : vector<8x128xf32>
    %242 = arith.divf %240, %241 : vector<8x128xf32>
    %243 = vector.extract_strided_slice %236 {offsets = [0, 128], sizes = [8, 128], strides = [1, 1]} : vector<8x512xf32> to vector<8x128xf32>
    %244 = arith.negf %243 : vector<8x128xf32>
    %245 = math.exp %244 : vector<8x128xf32>
    %cst_66 = arith.constant 1.000000e+00 : f32
    %246 = vector.broadcast %cst_66 : f32 to vector<8x128xf32>
    %247 = arith.addf %246, %245 : vector<8x128xf32>
    %248 = arith.divf %246, %247 : vector<8x128xf32>
    %249 = vector.extract_strided_slice %236 {offsets = [0, 256], sizes = [8, 128], strides = [1, 1]} : vector<8x512xf32> to vector<8x128xf32>
    %250 = math.tanh %249 : vector<8x128xf32>
    %251 = arith.mulf %248, %217 : vector<8x128xf32>
    %252 = arith.mulf %242, %250 : vector<8x128xf32>
    %253 = arith.addf %251, %252 : vector<8x128xf32>
    %254 = math.tanh %253 : vector<8x128xf32>
    %255 = vector.extract_strided_slice %236 {offsets = [0, 384], sizes = [8, 128], strides = [1, 1]} : vector<8x512xf32> to vector<8x128xf32>
    %256 = arith.negf %255 : vector<8x128xf32>
    %257 = math.exp %256 : vector<8x128xf32>
    %cst_67 = arith.constant 1.000000e+00 : f32
    %258 = vector.broadcast %cst_67 : f32 to vector<8x128xf32>
    %259 = arith.addf %258, %257 : vector<8x128xf32>
    %260 = arith.divf %258, %259 : vector<8x128xf32>
    %261 = arith.mulf %260, %254 : vector<8x128xf32>
    %c0_68 = arith.constant 0 : index
    %262 = arith.index_cast %231 : i32 to index
    %c0_69 = arith.constant 0 : index
    %263 = vector.load %arg5[%c0_68, %262, %c0_69] : memref<1x64x128xf32, #tpu.memory_space<vmem>>, vector<1x8x128xf32>
    %264 = vector.shape_cast %263 : vector<1x8x128xf32> to vector<8x128xf32>
    %265 = vector.shape_cast %261 : vector<8x128xf32> to vector<1x8x128xf32>
    tpu.vector_store %arg5[%c0_68, %262, %c0_69], %265 {strides = array<i32>} : memref<1x64x128xf32, #tpu.memory_space<vmem>>, vector<1x8x128xf32>,
    %c7_i32 = arith.constant 7 : i32
    %c8_i32_70 = arith.constant 8 : i32
    %266 = arith.muli %c7_i32, %c8_i32_70 : i32
    %267 = tpu.assume_multiple %266, 8 : i32
    %268 = arith.index_cast %267 : i32 to index
    %c0_71 = arith.constant 0 : index
    %269 = vector.load %arg6[%268, %c0_71] : memref<64x512xf32, #tpu.memory_space<vmem>>, vector<8x512xf32>
    %270 = arith.truncf %261 : vector<8x128xf32> to vector<8x128xbf16>
    %cst_72 = arith.constant dense<0.000000e+00> : vector<8x512xf32>
    %271 = tpu.matmul %270, %11, %cst_72 {dimension_numbers = #tpu.dot_dimension_numbers<[1], [0], [0], [1], [0, 0, 1, 1], [], []>} : vector<8x128xbf16>, vector<128x512xbf16>, vector<8x512xf32> -> vector<8x512xf32>
    %272 = arith.addf %269, %271 : vector<8x512xf32>
    %273 = vector.extract_strided_slice %272 {offsets = [0, 0], sizes = [8, 128], strides = [1, 1]} : vector<8x512xf32> to vector<8x128xf32>
    %274 = arith.negf %273 : vector<8x128xf32>
    %275 = math.exp %274 : vector<8x128xf32>
    %cst_73 = arith.constant 1.000000e+00 : f32
    %276 = vector.broadcast %cst_73 : f32 to vector<8x128xf32>
    %277 = arith.addf %276, %275 : vector<8x128xf32>
    %278 = arith.divf %276, %277 : vector<8x128xf32>
    %279 = vector.extract_strided_slice %272 {offsets = [0, 128], sizes = [8, 128], strides = [1, 1]} : vector<8x512xf32> to vector<8x128xf32>
    %280 = arith.negf %279 : vector<8x128xf32>
    %281 = math.exp %280 : vector<8x128xf32>
    %cst_74 = arith.constant 1.000000e+00 : f32
    %282 = vector.broadcast %cst_74 : f32 to vector<8x128xf32>
    %283 = arith.addf %282, %281 : vector<8x128xf32>
    %284 = arith.divf %282, %283 : vector<8x128xf32>
    %285 = vector.extract_strided_slice %272 {offsets = [0, 256], sizes = [8, 128], strides = [1, 1]} : vector<8x512xf32> to vector<8x128xf32>
    %286 = math.tanh %285 : vector<8x128xf32>
    %287 = arith.mulf %284, %253 : vector<8x128xf32>
    %288 = arith.mulf %278, %286 : vector<8x128xf32>
    %289 = arith.addf %287, %288 : vector<8x128xf32>
    %290 = math.tanh %289 : vector<8x128xf32>
    %291 = vector.extract_strided_slice %272 {offsets = [0, 384], sizes = [8, 128], strides = [1, 1]} : vector<8x512xf32> to vector<8x128xf32>
    %292 = arith.negf %291 : vector<8x128xf32>
    %293 = math.exp %292 : vector<8x128xf32>
    %cst_75 = arith.constant 1.000000e+00 : f32
    %294 = vector.broadcast %cst_75 : f32 to vector<8x128xf32>
    %295 = arith.addf %294, %293 : vector<8x128xf32>
    %296 = arith.divf %294, %295 : vector<8x128xf32>
    %297 = arith.mulf %296, %290 : vector<8x128xf32>
    %c0_76 = arith.constant 0 : index
    %298 = arith.index_cast %267 : i32 to index
    %c0_77 = arith.constant 0 : index
    %299 = vector.load %arg5[%c0_76, %298, %c0_77] : memref<1x64x128xf32, #tpu.memory_space<vmem>>, vector<1x8x128xf32>
    %300 = vector.shape_cast %299 : vector<1x8x128xf32> to vector<8x128xf32>
    %301 = vector.shape_cast %297 : vector<8x128xf32> to vector<1x8x128xf32>
    tpu.vector_store %arg5[%c0_76, %298, %c0_77], %301 {strides = array<i32>} : memref<1x64x128xf32, #tpu.memory_space<vmem>>, vector<1x8x128xf32>,
    %c8_i32_78 = arith.constant 8 : i32
    return
  }
  func.func @transform_0(%arg0: i32) -> (i32, i32, i32) {
    %c0_i32 = arith.constant 0 : i32
    %c0_i32_0 = arith.constant 0 : i32
    %c0_i32_1 = arith.constant 0 : i32
    return %arg0, %c0_i32, %c0_i32_0 : i32, i32, i32
  }
  func.func @transform_1(%arg0: i32) -> (i32, i32, i32) {
    %c0_i32 = arith.constant 0 : i32
    %c0_i32_0 = arith.constant 0 : i32
    %c0_i32_1 = arith.constant 0 : i32
    return %arg0, %c0_i32, %c0_i32_0 : i32, i32, i32
  }
  func.func @transform_2(%arg0: i32) -> (i32, i32, i32) {
    %c0_i32 = arith.constant 0 : i32
    %c0_i32_0 = arith.constant 0 : i32
    %c0_i32_1 = arith.constant 0 : i32
    return %arg0, %c0_i32, %c0_i32_0 : i32, i32, i32
  }
  func.func @transform_3(%arg0: i32) -> (i32, i32, i32) {
    %c0_i32 = arith.constant 0 : i32
    %c0_i32_0 = arith.constant 0 : i32
    %c0_i32_1 = arith.constant 0 : i32
    return %arg0, %c0_i32, %c0_i32_0 : i32, i32, i32
  }
  func.func @transform_4(%arg0: i32) -> (i32, i32, i32) {
    %c0_i32 = arith.constant 0 : i32
    %c0_i32_0 = arith.constant 0 : i32
    %c0_i32_1 = arith.constant 0 : i32
    return %arg0, %c0_i32, %c0_i32_0 : i32, i32, i32
  }
}

</mosaic_0001>

<llo_original>
// kernel: tpu_custom_call.1
$region0: #{tpu_custom_call.1}
  #allocation0 [shape = 'u32[]', space=smem, size = 0x4, offset = 0x4, fixed_abs, tag = 'smem constant byte address 0x4 - core index']
  #allocation1 [shape = 'u32[144,128]{1,0:T(1,128)}', space=vmem, size = 0x12000, scoped, tag = 'internal scratch']
  #allocation2 [shape = 'f32[64,512]{1,0:T(8,128)}', space=vmem, size = 0x20000, scoped, tag = 'scratch operand']
  %s0 = inlined_call_operand.hbm [shape: bf16[4,64,128], index: 0, kind: input, shape index: {}]
  %s1 = inlined_call_operand.hbm [shape: bf16[4,128,512], index: 1, kind: input, shape index: {}]
  %s2 = inlined_call_operand.hbm [shape: bf16[4,128,512], index: 2, kind: input, shape index: {}]
  %s3 = inlined_call_operand.hbm [shape: f32[4,1,512], index: 3, kind: input, shape index: {}]
  %s4 = inlined_call_operand.hbm [shape: f32[4,64,128], index: 4, kind: output, shape index: {}]
  %s5 = sld [smem:[#allocation0]]
  $region65: #{tpu_custom_call.1} parent=0
    _
  %s7 = ssub.s32 1, %s5
  %s8 = scalar_select 0, %s7, %s5
  $region1: #{tpu_custom_call.1} parent=0
    #allocation3 [shape = 'u8[32768]{0}', space=vmem, size = 0x8000, scoped, tag = 'input window, operand 0']
    #allocation4 [shape = 's32[2]{0}', space=sflag, size = 0x8, scoped, tag = 'scoped memory for tpu_custom_call.1']
    #allocation5 [shape = 's32[2]{0}', space=sflag, size = 0x8, scoped, tag = 'scoped memory for tpu_custom_call.1']
    #allocation6 [shape = 'u8[262144]{0}', space=vmem, size = 0x40000, scoped, tag = 'input window, operand 1']
    #allocation7 [shape = 's32[2]{0}', space=sflag, size = 0x8, scoped, tag = 'scoped memory for tpu_custom_call.1']
    #allocation8 [shape = 'u8[262144]{0}', space=vmem, size = 0x40000, scoped, tag = 'input window, operand 2']
    #allocation9 [shape = 'u8[4096]{0}', space=vmem, size = 0x1000, scoped, tag = 'input window, operand 3']
    #allocation10 [shape = 's32[2]{0}', space=sflag, size = 0x8, scoped, tag = 'scoped memory for tpu_custom_call.1']
    #allocation11 [shape = 'u8[65536]{0}', space=vmem, size = 0x10000, scoped, tag = 'output window, operand 0']
    %9 = vsyncpa [#allocation4], 0
    %s10 = scalar_lea.sflag [#allocation4], 1
    %11 = vsyncpa %s10, 0
    %12 = vsyncpa [#allocation7], 0
    %s13 = scalar_lea.sflag [#allocation7], 1
    %14 = vsyncpa %s13, 0
    %15 = vsyncpa [#allocation10], 0
    %s16 = scalar_lea.sflag [#allocation10], 1
    %17 = vsyncpa %s16, 0
    %18 = vsyncpa [#allocation5], 0
    %s19 = scalar_lea.sflag [#allocation5], 1
    %20 = vsyncpa %s19, 0
    loop: start=0, step=1, limit=6
    $region2: #{tpu_custom_call.1} parent=1 // loop_pre_header
      _
    $region3: #{tpu_custom_call.1} parent=1 // loop_header
      %s22 = sphi 0, %s26
      %p23 = scmp.ge.s32.totalorder %s22, 6
      %s32 = sphi 0, %s34
      %s35 = sphi 0, %s32
      %s36 = sphi 0, %s35
      %s52 = sphi 0, %s36
      %s58 = sphi 0, %s60
      %s61 = sphi 0, %s58
      %s62 = sphi 0, %s61
      %s78 = sphi 0, %s62
      %s84 = sphi 0, %s86
      %s87 = sphi 0, %s84
      %s88 = sphi 0, %s87
      %s104 = sphi 0, %s88
      %s110 = sphi 0, %s112
      %s113 = sphi 0, %s110
      %s114 = sphi 0, %s113
      %s130 = sphi 0, %s114
      %s136 = sphi 0, %s138
      %s139 = sphi 0, %s136
      %s140 = sphi 0, %s139
      %s156 = sphi 0, %s140
    $region4: #{tpu_custom_call.1} parent=1 // loop_header_branch
      %25 = sbr.rel (%p23) target = $region8
    $region5: #{tpu_custom_call.1} parent=1 // loop_body
      %s27 = ssub.s32 %s22, 1
      %s28 = ssub.s32 %s22, 2
      %s29 = sadd.s32 %s22, 1
      %s30 = ssub.s32 %s22, %s29
      %p31 = scmp.eq.s32.totalorder %s30, 0
      %s33 = sadd.s32 %s32, 1
      %s34 = scalar_select %p31, %s32, %s33
      %p37 = pneg %p31
      %p38 = scmp.eq.s32.totalorder %s22, 3
      %p39 = por %p37, %p38
      %p40 = scmp.ne.s32.totalorder %s32, %s35
      %p41 = scmp.eq.s32.totalorder %s22, 0
      %p42 = por %p40, %p41
      %p43 = scmp.ne.s32.totalorder %s32, %s35
      %p44 = scmp.eq.s32.totalorder %s27, 3
      %p45 = por %p43, %p44
      %p46 = scmp.ne.s32.totalorder %s35, %s36
      %p47 = scmp.eq.s32.totalorder %s27, 0
      %p48 = por %p46, %p47
      %p49 = scmp.ne.s32.totalorder %s35, %s36
      %p50 = scmp.eq.s32.totalorder %s28, 3
      %p51 = por %p49, %p50
      %p53 = scmp.ne.s32.totalorder %s36, %s52
      %p54 = scmp.eq.s32.totalorder %s28, 0
      %p55 = por %p53, %p54
      %s56 = ssub.s32 %s22, %s29
      %p57 = scmp.eq.s32.totalorder %s56, 0
      %s59 = sadd.s32 %s58, 1
      %s60 = scalar_select %p57, %s58, %s59
      %p63 = pneg %p57
      %p64 = scmp.eq.s32.totalorder %s22, 3
      %p65 = por %p63, %p64
      %p66 = scmp.ne.s32.totalorder %s58, %s61
      %p67 = scmp.eq.s32.totalorder %s22, 0
      %p68 = por %p66, %p67
      %p69 = scmp.ne.s32.totalorder %s58, %s61
      %p70 = scmp.eq.s32.totalorder %s27, 3
      %p71 = por %p69, %p70
      %p72 = scmp.ne.s32.totalorder %s61, %s62
      %p73 = scmp.eq.s32.totalorder %s27, 0
      %p74 = por %p72, %p73
      %p75 = scmp.ne.s32.totalorder %s61, %s62
      %p76 = scmp.eq.s32.totalorder %s28, 3
      %p77 = por %p75, %p76
      %p79 = scmp.ne.s32.totalorder %s62, %s78
      %p80 = scmp.eq.s32.totalorder %s28, 0
      %p81 = por %p79, %p80
      %s82 = ssub.s32 %s22, %s29
      %p83 = scmp.eq.s32.totalorder %s82, 0
      %s85 = sadd.s32 %s84, 1
      %s86 = scalar_select %p83, %s84, %s85
      %p89 = pneg %p83
      %p90 = scmp.eq.s32.totalorder %s22, 3
      %p91 = por %p89, %p90
      %p92 = scmp.ne.s32.totalorder %s84, %s87
      %p93 = scmp.eq.s32.totalorder %s22, 0
      %p94 = por %p92, %p93
      %p95 = scmp.ne.s32.totalorder %s84, %s87
      %p96 = scmp.eq.s32.totalorder %s27, 3
      %p97 = por %p95, %p96
      %p98 = scmp.ne.s32.totalorder %s87, %s88
      %p99 = scmp.eq.s32.totalorder %s27, 0
      %p100 = por %p98, %p99
      %p101 = scmp.ne.s32.totalorder %s87, %s88
      %p102 = scmp.eq.s32.totalorder %s28, 3
      %p103 = por %p101, %p102
      %p105 = scmp.ne.s32.totalorder %s88, %s104
      %p106 = scmp.eq.s32.totalorder %s28, 0
      %p107 = por %p105, %p106
      %s108 = ssub.s32 %s22, %s29
      %p109 = scmp.eq.s32.totalorder %s108, 0
      %s111 = sadd.s32 %s110, 1
      %s112 = scalar_select %p109, %s110, %s111
      %p115 = pneg %p109
      %p116 = scmp.eq.s32.totalorder %s22, 3
      %p117 = por %p115, %p116
      %p118 = scmp.ne.s32.totalorder %s110, %s113
      %p119 = scmp.eq.s32.totalorder %s22, 0
      %p120 = por %p118, %p119
      %p121 = scmp.ne.s32.totalorder %s110, %s113
      %p122 = scmp.eq.s32.totalorder %s27, 3
      %p123 = por %p121, %p122
      %p124 = scmp.ne.s32.totalorder %s113, %s114
      %p125 = scmp.eq.s32.totalorder %s27, 0
      %p126 = por %p124, %p125
      %p127 = scmp.ne.s32.totalorder %s113, %s114
      %p128 = scmp.eq.s32.totalorder %s28, 3
      %p129 = por %p127, %p128
      %p131 = scmp.ne.s32.totalorder %s114, %s130
      %p132 = scmp.eq.s32.totalorder %s28, 0
      %p133 = por %p131, %p132
      %s134 = ssub.s32 %s22, %s29
      %p135 = scmp.eq.s32.totalorder %s134, 0
      %s137 = sadd.s32 %s136, 1
      %s138 = scalar_select %p135, %s136, %s137
      %p141 = pneg %p135
      %p142 = scmp.eq.s32.totalorder %s22, 3
      %p143 = por %p141, %p142
      %p144 = scmp.ne.s32.totalorder %s136, %s139
      %p145 = scmp.eq.s32.totalorder %s22, 0
      %p146 = por %p144, %p145
      %p147 = scmp.ne.s32.totalorder %s136, %s139
      %p148 = scmp.eq.s32.totalorder %s27, 3
      %p149 = por %p147, %p148
      %p150 = scmp.ne.s32.totalorder %s139, %s140
      %p151 = scmp.eq.s32.totalorder %s27, 0
      %p152 = por %p150, %p151
      %p153 = scmp.ne.s32.totalorder %s139, %s140
      %p154 = scmp.eq.s32.totalorder %s28, 3
      %p155 = por %p153, %p154
      %p157 = scmp.ne.s32.totalorder %s140, %s156
      %p158 = scmp.eq.s32.totalorder %s28, 0
      %p159 = por %p157, %p158
      %p160 = scmp.le.s32.totalorder 1, %s22
      %p161 = scmp.lt.s32.totalorder %s22, 5
      %p162 = pnand %p160, %p161
      %p163 = pneg %p162
      // Predicated region
      $region9: #{tpu_custom_call.1} parent=5 // pred_check
        _
      $region10: #{tpu_custom_call.1} parent=5 // pred_check_branch
        %165 = sbr.rel (%p162) target = $region12
      $region11: #{tpu_custom_call.1} parent=5 // pred_region
        %s166 = ssub.s32 %s22, 1
      $region12: #{tpu_custom_call.1} parent=5 // pred_fallthru
        _
      %p167 = scmp.lt.s32.totalorder %s22, 4
      // Predicated region
      $region13: #{tpu_custom_call.1} parent=5 // pred_check
        %p168 = pneg %p167
      $region14: #{tpu_custom_call.1} parent=5 // pred_check_branch
        %170 = sbr.rel (%p168) target = $region16
      $region15: #{tpu_custom_call.1} parent=5 // pred_region
        // Predicated region
        $region17: #{tpu_custom_call.1} parent=15 // pred_check
          %p171 = pneg %p42
        $region18: #{tpu_custom_call.1} parent=15 // pred_check_branch
          %173 = sbr.rel (%p171) target = $region20
        $region19: #{tpu_custom_call.1} parent=15 // pred_region
          %s174 = sand.u32 %s32, 1
          %s175 = scalar_lea.sflag [#allocation4], %s174
          %s176 = sand.u32 %s32, 1
          %s177 = smul.addr %s176, 32
          %s178 = scalar_lea.vmem [#allocation3], %s177
          %s180 = ssub.s32 512, 512
          %181 = vsyncadd %s175, %s180
          %s182 = smul.addr %s22, 8
          %s183 = smul.addr %s182, 64
          %s184 = scalar_lea.hbm %s0, %s183
          %s185 = sshll.u32 %s178, 4
          %s186 = int_to_ptr.vmem [resolvable:$true] %s185
          %191 = dma.hbm_to_vmem [thread:$0]  %s184, 512, %s186, %s175, 64, 64, 4
        $region20: #{tpu_custom_call.1} parent=15 // pred_fallthru
          _
        // Predicated region
        $region21: #{tpu_custom_call.1} parent=15 // pred_check
          %p192 = pneg %p68
        $region22: #{tpu_custom_call.1} parent=15 // pred_check_branch
          %194 = sbr.rel (%p192) target = $region24
        $region23: #{tpu_custom_call.1} parent=15 // pred_region
          %s195 = sand.u32 %s22, 1
          %s196 = scalar_lea.sflag [#allocation7], %s195
          %s197 = sand.u32 %s58, 1
          %s198 = smul.addr %s197, 256
          %s199 = scalar_lea.vmem [#allocation6], %s198
          %s201 = ssub.s32 4096, 4096
          %202 = vsyncadd %s196, %s201
          %s203 = smul.addr %s22, 64
          %s204 = smul.addr %s203, 64
          %s205 = scalar_lea.hbm %s1, %s204
          %s206 = sshll.u32 %s199, 4
          %s207 = int_to_ptr.vmem [resolvable:$true] %s206
          %212 = dma.hbm_to_vmem [thread:$0]  %s205, 4096, %s207, %s196, 256, 256, 16
        $region24: #{tpu_custom_call.1} parent=15 // pred_fallthru
          _
        // Predicated region
        $region25: #{tpu_custom_call.1} parent=15 // pred_check
          %p213 = pneg %p94
        $region26: #{tpu_custom_call.1} parent=15 // pred_check_branch
          %215 = sbr.rel (%p213) target = $region28
        $region27: #{tpu_custom_call.1} parent=15 // pred_region
          %s216 = sand.u32 %s22, 1
          %s217 = scalar_lea.sflag [#allocation7], %s216
          %s218 = sand.u32 %s84, 1
          %s219 = smul.addr %s218, 256
          %s220 = scalar_lea.vmem [#allocation8], %s219
          %s222 = ssub.s32 4096, 4096
          %223 = vsyncadd %s217, %s222
          %s224 = smul.addr %s22, 64
          %s225 = smul.addr %s224, 64
          %s226 = scalar_lea.hbm %s2, %s225
          %s227 = sshll.u32 %s220, 4
          %s228 = int_to_ptr.vmem [resolvable:$true] %s227
          %233 = dma.hbm_to_vmem [thread:$0]  %s226, 4096, %s228, %s217, 256, 256, 16
        $region28: #{tpu_custom_call.1} parent=15 // pred_fallthru
          _
        // Predicated region
        $region29: #{tpu_custom_call.1} parent=15 // pred_check
          %p234 = pneg %p120
        $region30: #{tpu_custom_call.1} parent=15 // pred_check_branch
          %236 = sbr.rel (%p234) target = $region32
        $region31: #{tpu_custom_call.1} parent=15 // pred_region
          %s237 = sand.u32 %s110, 1
          %s238 = scalar_lea.sflag [#allocation10], %s237
          %s239 = sand.u32 %s110, 1
          %s240 = smul.addr %s239, 4
          %s241 = scalar_lea.vmem [#allocation9], %s240
          %s243 = ssub.s32 64, 64
          %244 = vsyncadd %s238, %s243
          %s245 = smul.addr %s22, 4
          %s246 = smul.addr %s245, 16
          %s247 = scalar_lea.hbm %s3, %s246
          %s249 = sshll.u32 %s241, 4
          %s250 = int_to_ptr.vmem [resolvable:$true] %s249
          %252 = dma.hbm_to_vmem [thread:$0]  %s247, 64, %s250, %s238
        $region32: #{tpu_custom_call.1} parent=15 // pred_fallthru
          _
      $region16: #{tpu_custom_call.1} parent=5 // pred_fallthru
        _
      %p253 = scmp.le.s32.totalorder 1, %s22
      %p254 = scmp.lt.s32.totalorder %s22, 5
      %p255 = pnand %p253, %p254
      %p256 = pneg %p255
      // Predicated region
      $region33: #{tpu_custom_call.1} parent=5 // pred_check
        _
      $region34: #{tpu_custom_call.1} parent=5 // pred_check_branch
        %258 = sbr.rel (%p255) target = $region36
      $region35: #{tpu_custom_call.1} parent=5 // pred_region
        %s259 = ssub.s32 %s22, 1
        %s260 = sand.u32 %s35, 1
        %s261 = scalar_lea.sflag [#allocation4], %s260
        %s262 = sand.u32 %s35, 1
        %s263 = smul.addr %s262, 32
        %s264 = scalar_lea.vmem [#allocation3], %s263
        // Predicated region
        $region37: #{tpu_custom_call.1} parent=35 // pred_check
          %p265 = pneg %p48
        $region38: #{tpu_custom_call.1} parent=35 // pred_check_branch
          %267 = sbr.rel (%p265) target = $region40
        $region39: #{tpu_custom_call.1} parent=35 // pred_region
          %268 = dma.done %s261, 512
        $region40: #{tpu_custom_call.1} parent=35 // pred_fallthru
          _
        %s269 = sand.u32 %s27, 1
        %s270 = scalar_lea.sflag [#allocation7], %s269
        %s271 = sand.u32 %s61, 1
        %s272 = smul.addr %s271, 256
        %s273 = scalar_lea.vmem [#allocation6], %s272
        // Predicated region
        $region41: #{tpu_custom_call.1} parent=35 // pred_check
          %p274 = pneg %p74
        $region42: #{tpu_custom_call.1} parent=35 // pred_check_branch
          %276 = sbr.rel (%p274) target = $region44
        $region43: #{tpu_custom_call.1} parent=35 // pred_region
          %277 = dma.done %s270, 4096
        $region44: #{tpu_custom_call.1} parent=35 // pred_fallthru
          _
        %s278 = sand.u32 %s27, 1
        %s279 = scalar_lea.sflag [#allocation7], %s278
        %s280 = sand.u32 %s87, 1
        %s281 = smul.addr %s280, 256
        %s282 = scalar_lea.vmem [#allocation8], %s281
        // Predicated region
        $region45: #{tpu_custom_call.1} parent=35 // pred_check
          %p283 = pneg %p100
        $region46: #{tpu_custom_call.1} parent=35 // pred_check_branch
          %285 = sbr.rel (%p283) target = $region48
        $region47: #{tpu_custom_call.1} parent=35 // pred_region
          %286 = dma.done %s279, 4096
        $region48: #{tpu_custom_call.1} parent=35 // pred_fallthru
          _
        %s287 = sand.u32 %s113, 1
        %s288 = scalar_lea.sflag [#allocation10], %s287
        %s289 = sand.u32 %s113, 1
        %s290 = smul.addr %s289, 4
        %s291 = scalar_lea.vmem [#allocation9], %s290
        // Predicated region
        $region49: #{tpu_custom_call.1} parent=35 // pred_check
          %p292 = pneg %p126
        $region50: #{tpu_custom_call.1} parent=35 // pred_check_branch
          %294 = sbr.rel (%p292) target = $region52
        $region51: #{tpu_custom_call.1} parent=35 // pred_region
          %295 = dma.done %s288, 64
        $region52: #{tpu_custom_call.1} parent=35 // pred_fallthru
          _
        %s296 = sand.u32 %s35, 1
        %s297 = scalar_lea.sflag [#allocation4], %s296
        %s298 = sand.u32 %s35, 1
        %s299 = smul.addr %s298, 32
        %s300 = scalar_lea.vmem [#allocation3], %s299
        %p301 = pneg %p48
        %p302 = pneg %p45
        %s303 = sand.u32 %s27, 1
        %s304 = scalar_lea.sflag [#allocation7], %s303
        %s305 = sand.u32 %s61, 1
        %s306 = smul.addr %s305, 256
        %s307 = scalar_lea.vmem [#allocation6], %s306
        %p308 = pneg %p74
        %p309 = pneg %p71
        %s310 = sand.u32 %s27, 1
        %s311 = scalar_lea.sflag [#allocation7], %s310
        %s312 = sand.u32 %s87, 1
        %s313 = smul.addr %s312, 256
        %s314 = scalar_lea.vmem [#allocation8], %s313
        %p315 = pneg %p100
        %p316 = pneg %p97
        %s317 = sand.u32 %s113, 1
        %s318 = scalar_lea.sflag [#allocation10], %s317
        %s319 = sand.u32 %s113, 1
        %s320 = smul.addr %s319, 4
        %s321 = scalar_lea.vmem [#allocation9], %s320
        %p322 = pneg %p126
        %p323 = pneg %p123
        %p324 = pneg %p152
        %p325 = pneg %p149
        %s326 = sand.u32 %s139, 1
        %s327 = scalar_lea.sflag [#allocation5], %s326
        %s328 = sand.u32 %s139, 1
        %s329 = smul.addr %s328, 64
        %s330 = scalar_lea.vmem [#allocation11], %s329
        %v332 = vld [vmem:[%s264] sm:$0xf]
        %v333 = vld [vmem:[%s264 + $0x4] sm:$0xf]
        %v334 = vld [vmem:[%s264 + $0x8] sm:$0xf]
        %v335 = vld [vmem:[%s264 + $0xc] sm:$0xf]
        %v336 = vld [vmem:[%s264 + $0x10] sm:$0xf]
        %v337 = vld [vmem:[%s264 + $0x14] sm:$0xf]
        %v338 = vld [vmem:[%s264 + $0x18] sm:$0xf]
        %v339 = vld [vmem:[%s264 + $0x1c] sm:$0xf]
        %v340 = vld [vmem:[%s273] sm:$0xff]
        %v341 = vld [vmem:[%s273 + $0x8] sm:$0xff]
        %v342 = vld [vmem:[%s273 + $0x10] sm:$0xff]
        %v343 = vld [vmem:[%s273 + $0x18] sm:$0xff]
        %v344 = vld [vmem:[%s273 + $0x20] sm:$0xff]
        %v345 = vld [vmem:[%s273 + $0x28] sm:$0xff]
        %v346 = vld [vmem:[%s273 + $0x30] sm:$0xff]
        %v347 = vld [vmem:[%s273 + $0x38] sm:$0xff]
        %v348 = vld [vmem:[%s273 + $0x40] sm:$0xff]
        %v349 = vld [vmem:[%s273 + $0x48] sm:$0xff]
        %v350 = vld [vmem:[%s273 + $0x50] sm:$0xff]
        %v351 = vld [vmem:[%s273 + $0x58] sm:$0xff]
        %v352 = vld [vmem:[%s273 + $0x60] sm:$0xff]
        %v353 = vld [vmem:[%s273 + $0x68] sm:$0xff]
        %v354 = vld [vmem:[%s273 + $0x70] sm:$0xff]
        %v355 = vld [vmem:[%s273 + $0x78] sm:$0xff]
        %v356 = vld [vmem:[%s273 + $0x80] sm:$0xff]
        %v357 = vld [vmem:[%s273 + $0x88] sm:$0xff]
        %v358 = vld [vmem:[%s273 + $0x90] sm:$0xff]
        %v359 = vld [vmem:[%s273 + $0x98] sm:$0xff]
        %v360 = vld [vmem:[%s273 + $0xa0] sm:$0xff]
        %v361 = vld [vmem:[%s273 + $0xa8] sm:$0xff]
        %v362 = vld [vmem:[%s273 + $0xb0] sm:$0xff]
        %v363 = vld [vmem:[%s273 + $0xb8] sm:$0xff]
        %v364 = vld [vmem:[%s273 + $0xc0] sm:$0xff]
        %v365 = vld [vmem:[%s273 + $0xc8] sm:$0xff]
        %v366 = vld [vmem:[%s273 + $0xd0] sm:$0xff]
        %v367 = vld [vmem:[%s273 + $0xd8] sm:$0xff]
        %v368 = vld [vmem:[%s273 + $0xe0] sm:$0xff]
        %v369 = vld [vmem:[%s273 + $0xe8] sm:$0xff]
        %v370 = vld [vmem:[%s273 + $0xf0] sm:$0xff]
        %v371 = vld [vmem:[%s273 + $0xf8] sm:$0xff]
        %v372 = vld [vmem:[%s291] sm:$0xf]
        %v374 = vlaneseq
        %v375 = vshrl.u32 %v374, 7
        %v376 = vsub.s32 0, %v375
        %v377 = vrot.slane %v372, %v376
        %v378 = vlaneseq
        %v379 = vshrl.u32 %v378, 7
        %v380 = vsub.s32 1, %v379
        %v381 = vrot.slane %v372, %v380
        %v382 = vlaneseq
        %v383 = vshrl.u32 %v382, 7
        %v384 = vsub.s32 2, %v383
        %v385 = vrot.slane %v372, %v384
        %v386 = vlaneseq
        %v387 = vshrl.u32 %v386, 7
        %v388 = vsub.s32 3, %v387
        %v389 = vrot.slane %v372, %v388
        %v402 = vunpack.c.l.b16 %v332
        %v403 = vunpack.c.l.b16 %v333
        %v404 = vunpack.c.l.b16 %v334
        %v405 = vunpack.c.l.b16 %v335
        %v406 = vunpack.c.l.b16 %v336
        %v407 = vunpack.c.l.b16 %v337
        %v408 = vunpack.c.l.b16 %v338
        %v409 = vunpack.c.l.b16 %v339
        %v410 = vpack.c.b16 %v403, %v402
        %v411 = vpack.c.b16 %v405, %v404
        %v412 = vpack.c.b16 %v407, %v406
        %v413 = vpack.c.b16 %v409, %v408
        %v450 = vunpack.c.l.b16 %v340
        %v451 = vunpack.c.h.b16 %v340
        %v452 = vunpack.c.l.b16 %v341
        %v453 = vunpack.c.h.b16 %v341
        %v454 = vunpack.c.l.b16 %v342
        %v455 = vunpack.c.h.b16 %v342
        %v456 = vunpack.c.l.b16 %v343
        %v457 = vunpack.c.h.b16 %v343
        %v458 = vunpack.c.l.b16 %v344
        %v459 = vunpack.c.h.b16 %v344
        %v460 = vunpack.c.l.b16 %v345
        %v461 = vunpack.c.h.b16 %v345
        %v462 = vunpack.c.l.b16 %v346
        %v463 = vunpack.c.h.b16 %v346
        %v464 = vunpack.c.l.b16 %v347
        %v465 = vunpack.c.h.b16 %v347
        %v466 = vunpack.c.l.b16 %v348
        %v467 = vunpack.c.h.b16 %v348
        %v468 = vunpack.c.l.b16 %v349
        %v469 = vunpack.c.h.b16 %v349
        %v470 = vunpack.c.l.b16 %v350
        %v471 = vunpack.c.h.b16 %v350
        %v472 = vunpack.c.l.b16 %v351
        %v473 = vunpack.c.h.b16 %v351
        %v474 = vunpack.c.l.b16 %v352
        %v475 = vunpack.c.h.b16 %v352
        %v476 = vunpack.c.l.b16 %v353
        %v477 = vunpack.c.h.b16 %v353
        %v478 = vunpack.c.l.b16 %v354
        %v479 = vunpack.c.h.b16 %v354
        %v480 = vunpack.c.l.b16 %v355
        %v481 = vunpack.c.h.b16 %v355
        %v482 = vunpack.c.l.b16 %v356
        %v483 = vunpack.c.h.b16 %v356
        %v484 = vunpack.c.l.b16 %v357
        %v485 = vunpack.c.h.b16 %v357
        %v486 = vunpack.c.l.b16 %v358
        %v487 = vunpack.c.h.b16 %v358
        %v488 = vunpack.c.l.b16 %v359
        %v489 = vunpack.c.h.b16 %v359
        %v490 = vunpack.c.l.b16 %v360
        %v491 = vunpack.c.h.b16 %v360
        %v492 = vunpack.c.l.b16 %v361
        %v493 = vunpack.c.h.b16 %v361
        %v494 = vunpack.c.l.b16 %v362
        %v495 = vunpack.c.h.b16 %v362
        %v496 = vunpack.c.l.b16 %v363
        %v497 = vunpack.c.h.b16 %v363
        %v498 = vunpack.c.l.b16 %v364
        %v499 = vunpack.c.h.b16 %v364
        %v500 = vunpack.c.l.b16 %v365
        %v501 = vunpack.c.h.b16 %v365
        %v502 = vunpack.c.l.b16 %v366
        %v503 = vunpack.c.h.b16 %v366
        %v504 = vunpack.c.l.b16 %v367
        %v505 = vunpack.c.h.b16 %v367
        %v506 = vunpack.c.l.b16 %v368
        %v507 = vunpack.c.h.b16 %v368
        %v508 = vunpack.c.l.b16 %v369
        %v509 = vunpack.c.h.b16 %v369
        %v510 = vunpack.c.l.b16 %v370
        %v511 = vunpack.c.h.b16 %v370
        %v512 = vunpack.c.l.b16 %v371
        %v513 = vunpack.c.h.b16 %v371
        %v514 = vpack.c.b16 %v454, %v450
        %v515 = vpack.c.b16 %v455, %v451
        %v516 = vpack.c.b16 %v456, %v452
        %v517 = vpack.c.b16 %v457, %v453
        %v518 = vpack.c.b16 %v462, %v458
        %v519 = vpack.c.b16 %v463, %v459
        %v520 = vpack.c.b16 %v464, %v460
        %v521 = vpack.c.b16 %v465, %v461
        %v522 = vpack.c.b16 %v470, %v466
        %v523 = vpack.c.b16 %v471, %v467
        %v524 = vpack.c.b16 %v472, %v468
        %v525 = vpack.c.b16 %v473, %v469
        %v526 = vpack.c.b16 %v478, %v474
        %v527 = vpack.c.b16 %v479, %v475
        %v528 = vpack.c.b16 %v480, %v476
        %v529 = vpack.c.b16 %v481, %v477
        %v530 = vpack.c.b16 %v486, %v482
        %v531 = vpack.c.b16 %v487, %v483
        %v532 = vpack.c.b16 %v488, %v484
        %v533 = vpack.c.b16 %v489, %v485
        %v534 = vpack.c.b16 %v494, %v490
        %v535 = vpack.c.b16 %v495, %v491
        %v536 = vpack.c.b16 %v496, %v492
        %v537 = vpack.c.b16 %v497, %v493
        %v538 = vpack.c.b16 %v502, %v498
        %v539 = vpack.c.b16 %v503, %v499
        %v540 = vpack.c.b16 %v504, %v500
        %v541 = vpack.c.b16 %v505, %v501
        %v542 = vpack.c.b16 %v510, %v506
        %v543 = vpack.c.b16 %v511, %v507
        %v544 = vpack.c.b16 %v512, %v508
        %v545 = vpack.c.b16 %v513, %v509
        %578 = vmatprep.subr.bf16.mxu0 %v515
        %579 = vmatpush1.bf16.msra.mxu0 %v514
        %580 = vmatprep.subr.bf16.mxu0 %v519
        %581 = vmatpush1.bf16.msra.mxu0 %v518
        %582 = vmatprep.subr.bf16.mxu0 %v523
        %583 = vmatpush1.bf16.msra.mxu0 %v522
        %584 = vmatprep.subr.bf16.mxu0 %v527
        %585 = vmatpush1.bf16.msra.mxu0 %v526
        %586 = vmatprep.subr.bf16.mxu0 %v531
        %587 = vmatpush1.bf16.msra.mxu0 %v530
        %588 = vmatprep.subr.bf16.mxu0 %v535
        %589 = vmatpush1.bf16.msra.mxu0 %v534
        %590 = vmatprep.subr.bf16.mxu0 %v539
        %591 = vmatpush1.bf16.msra.mxu0 %v538
        %592 = vmatprep.subr.bf16.mxu0 %v543
        %593 = vmatpush1.bf16.msra.mxu0 %v542
        %594 = vmatprep.subr.bf16.mxu0 0
        %595 = vmatpush1.bf16.msra.mxu0 0
        %596 = vmatprep.subr.bf16.mxu0 0
        %597 = vmatpush1.bf16.msra.mxu0 0
        %598 = vmatprep.subr.bf16.mxu0 0
        %599 = vmatpush1.bf16.msra.mxu0 0
        %600 = vmatprep.subr.bf16.mxu0 0
        %601 = vmatpush1.bf16.msra.mxu0 0
        %602 = vmatprep.subr.bf16.mxu0 0
        %603 = vmatpush1.bf16.msra.mxu0 0
        %604 = vmatprep.subr.bf16.mxu0 0
        %605 = vmatpush1.bf16.msra.mxu0 0
        %606 = vmatprep.subr.bf16.mxu0 0
        %607 = vmatpush1.bf16.msra.mxu0 0
        %608 = vmatprep.subr.bf16.mxu0 0
        %609 = vmatpush1.bf16.msra.mxu0 0
        %610 = vmatprep.mubr.bf16.mxu0 0
        %611 = vmatmul.mubr.bf16.gmra.mrb[0].mxu0 %v410
        %v612 = vpop.f32.mrb[0].mxu0
        %v613 = vadd.f32 %v377, %v612
        %v614 = vpop.f32.mrb[0].mxu0
        %v615 = vadd.f32 %v381, %v614
        %v616 = vpop.f32.mrb[0].mxu0
        %v617 = vadd.f32 %v377, %v616
        %v618 = vpop.f32.mrb[0].mxu0
        %v619 = vadd.f32 %v381, %v618
        %620 = vmatprep.mubr.bf16.mxu0 0
        %621 = vmatmul.mubr.bf16.gmra.mrb[0].mxu0 %v411
        %v622 = vpop.f32.mrb[0].mxu0
        %v623 = vadd.f32 %v377, %v622
        %v624 = vpop.f32.mrb[0].mxu0
        %v625 = vadd.f32 %v381, %v624
        %v626 = vpop.f32.mrb[0].mxu0
        %v627 = vadd.f32 %v377, %v626
        %v628 = vpop.f32.mrb[0].mxu0
        %v629 = vadd.f32 %v381, %v628
        %630 = vmatprep.mubr.bf16.mxu0 0
        %631 = vmatmul.mubr.bf16.gmra.mrb[0].mxu0 %v412
        %v632 = vpop.f32.mrb[0].mxu0
        %v633 = vadd.f32 %v377, %v632
        %v634 = vpop.f32.mrb[0].mxu0
        %v635 = vadd.f32 %v381, %v634
        %v636 = vpop.f32.mrb[0].mxu0
        %v637 = vadd.f32 %v377, %v636
        %v638 = vpop.f32.mrb[0].mxu0
        %v639 = vadd.f32 %v381, %v638
        %640 = vmatprep.mubr.bf16.mxu0 0
        %641 = vmatmul.mubr.bf16.gmra.mrb[0].mxu0 %v413
        %v642 = vpop.f32.mrb[0].mxu0
        %v643 = vadd.f32 %v377, %v642
        %v644 = vpop.f32.mrb[0].mxu0
        %v645 = vadd.f32 %v381, %v644
        %v646 = vpop.f32.mrb[0].mxu0
        %v647 = vadd.f32 %v377, %v646
        %v648 = vpop.f32.mrb[0].mxu0
        %v649 = vadd.f32 %v381, %v648
        %650 = vdwg.mxu0
        %651 = vmatprep.subr.bf16.mxu0 %v517
        %652 = vmatpush1.bf16.msra.mxu0 %v516
        %653 = vmatprep.subr.bf16.mxu0 %v521
        %654 = vmatpush1.bf16.msra.mxu0 %v520
        %655 = vmatprep.subr.bf16.mxu0 %v525
        %656 = vmatpush1.bf16.msra.mxu0 %v524
        %657 = vmatprep.subr.bf16.mxu0 %v529
        %658 = vmatpush1.bf16.msra.mxu0 %v528
        %659 = vmatprep.subr.bf16.mxu0 %v533
        %660 = vmatpush1.bf16.msra.mxu0 %v532
        %661 = vmatprep.subr.bf16.mxu0 %v537
        %662 = vmatpush1.bf16.msra.mxu0 %v536
        %663 = vmatprep.subr.bf16.mxu0 %v541
        %664 = vmatpush1.bf16.msra.mxu0 %v540
        %665 = vmatprep.subr.bf16.mxu0 %v545
        %666 = vmatpush1.bf16.msra.mxu0 %v544
        %667 = vmatprep.subr.bf16.mxu0 0
        %668 = vmatpush1.bf16.msra.mxu0 0
        %669 = vmatprep.subr.bf16.mxu0 0
        %670 = vmatpush1.bf16.msra.mxu0 0
        %671 = vmatprep.subr.bf16.mxu0 0
        %672 = vmatpush1.bf16.msra.mxu0 0
        %673 = vmatprep.subr.bf16.mxu0 0
        %674 = vmatpush1.bf16.msra.mxu0 0
        %675 = vmatprep.subr.bf16.mxu0 0
        %676 = vmatpush1.bf16.msra.mxu0 0
        %677 = vmatprep.subr.bf16.mxu0 0
        %678 = vmatpush1.bf16.msra.mxu0 0
        %679 = vmatprep.subr.bf16.mxu0 0
        %680 = vmatpush1.bf16.msra.mxu0 0
        %681 = vmatprep.subr.bf16.mxu0 0
        %682 = vmatpush1.bf16.msra.mxu0 0
        %683 = vmatprep.mubr.bf16.mxu0 0
        %684 = vmatmul.mubr.bf16.gmra.mrb[0].mxu0 %v410
        %v685 = vpop.f32.mrb[0].mxu0
        %v686 = vadd.f32 %v385, %v685
        %v687 = vpop.f32.mrb[0].mxu0
        %v688 = vadd.f32 %v389, %v687
        %v689 = vpop.f32.mrb[0].mxu0
        %v690 = vadd.f32 %v385, %v689
        %v691 = vpop.f32.mrb[0].mxu0
        %v692 = vadd.f32 %v389, %v691
        %693 = vmatprep.mubr.bf16.mxu0 0
        %694 = vmatmul.mubr.bf16.gmra.mrb[0].mxu0 %v411
        %v695 = vpop.f32.mrb[0].mxu0
        %v696 = vadd.f32 %v385, %v695
        %v697 = vpop.f32.mrb[0].mxu0
        %v698 = vadd.f32 %v389, %v697
        %v699 = vpop.f32.mrb[0].mxu0
        %v700 = vadd.f32 %v385, %v699
        %v701 = vpop.f32.mrb[0].mxu0
        %v702 = vadd.f32 %v389, %v701
        %703 = vmatprep.mubr.bf16.mxu0 0
        %704 = vmatmul.mubr.bf16.gmra.mrb[0].mxu0 %v412
        %v705 = vpop.f32.mrb[0].mxu0
        %v706 = vadd.f32 %v385, %v705
        %v707 = vpop.f32.mrb[0].mxu0
        %v708 = vadd.f32 %v389, %v707
        %v709 = vpop.f32.mrb[0].mxu0
        %v710 = vadd.f32 %v385, %v709
        %v711 = vpop.f32.mrb[0].mxu0
        %v712 = vadd.f32 %v389, %v711
        %713 = vmatprep.mubr.bf16.mxu0 0
        %714 = vmatmul.mubr.bf16.gmra.mrb[0].mxu0 %v413
        %v715 = vpop.f32.mrb[0].mxu0
        %v716 = vadd.f32 %v385, %v715
        %v717 = vpop.f32.mrb[0].mxu0
        %v718 = vadd.f32 %v389, %v717
        %v719 = vpop.f32.mrb[0].mxu0
        %v720 = vadd.f32 %v385, %v719
        %v721 = vpop.f32.mrb[0].mxu0
        %v722 = vadd.f32 %v389, %v721
        %723 = vdwg.mxu0
        %724 = vst [vmem:[#allocation2] sm:$0xff] %v613
        %725 = vst [vmem:[#allocation2 + $0x8] sm:$0xff] %v615
        %726 = vst [vmem:[#allocation2 + $0x10] sm:$0xff] %v686
        %727 = vst [vmem:[#allocation2 + $0x18] sm:$0xff] %v688
        %728 = vst [vmem:[#allocation2 + $0x20] sm:$0xff] %v617
        %729 = vst [vmem:[#allocation2 + $0x28] sm:$0xff] %v619
        %730 = vst [vmem:[#allocation2 + $0x30] sm:$0xff] %v690
        %731 = vst [vmem:[#allocation2 + $0x38] sm:$0xff] %v692
        %732 = vst [vmem:[#allocation2 + $0x40] sm:$0xff] %v623
        %733 = vst [vmem:[#allocation2 + $0x48] sm:$0xff] %v625
        %734 = vst [vmem:[#allocation2 + $0x50] sm:$0xff] %v696
        %735 = vst [vmem:[#allocation2 + $0x58] sm:$0xff] %v698
        %736 = vst [vmem:[#allocation2 + $0x60] sm:$0xff] %v627
        %737 = vst [vmem:[#allocation2 + $0x68] sm:$0xff] %v629
        %738 = vst [vmem:[#allocation2 + $0x70] sm:$0xff] %v700
        %739 = vst [vmem:[#allocation2 + $0x78] sm:$0xff] %v702
        %740 = vst [vmem:[#allocation2 + $0x80] sm:$0xff] %v633
        %741 = vst [vmem:[#allocation2 + $0x88] sm:$0xff] %v635
        %742 = vst [vmem:[#allocation2 + $0x90] sm:$0xff] %v706
        %743 = vst [vmem:[#allocation2 + $0x98] sm:$0xff] %v708
        %744 = vst [vmem:[#allocation2 + $0xa0] sm:$0xff] %v637
        %745 = vst [vmem:[#allocation2 + $0xa8] sm:$0xff] %v639
        %746 = vst [vmem:[#allocation2 + $0xb0] sm:$0xff] %v710
        %747 = vst [vmem:[#allocation2 + $0xb8] sm:$0xff] %v712
        %748 = vst [vmem:[#allocation2 + $0xc0] sm:$0xff] %v643
        %749 = vst [vmem:[#allocation2 + $0xc8] sm:$0xff] %v645
        %750 = vst [vmem:[#allocation2 + $0xd0] sm:$0xff] %v716
        %751 = vst [vmem:[#allocation2 + $0xd8] sm:$0xff] %v718
        %752 = vst [vmem:[#allocation2 + $0xe0] sm:$0xff] %v647
        %753 = vst [vmem:[#allocation2 + $0xe8] sm:$0xff] %v649
        %754 = vst [vmem:[#allocation2 + $0xf0] sm:$0xff] %v720
        %755 = vst [vmem:[#allocation2 + $0xf8] sm:$0xff] %v722
        %v756 = vld [vmem:[%s282] sm:$0xff]
        %v757 = vld [vmem:[%s282 + $0x8] sm:$0xff]
        %v758 = vld [vmem:[%s282 + $0x10] sm:$0xff]
        %v759 = vld [vmem:[%s282 + $0x18] sm:$0xff]
        %v760 = vld [vmem:[%s282 + $0x20] sm:$0xff]
        %v761 = vld [vmem:[%s282 + $0x28] sm:$0xff]
        %v762 = vld [vmem:[%s282 + $0x30] sm:$0xff]
        %v763 = vld [vmem:[%s282 + $0x38] sm:$0xff]
        %v764 = vld [vmem:[%s282 + $0x40] sm:$0xff]
        %v765 = vld [vmem:[%s282 + $0x48] sm:$0xff]
        %v766 = vld [vmem:[%s282 + $0x50] sm:$0xff]
        %v767 = vld [vmem:[%s282 + $0x58] sm:$0xff]
        %v768 = vld [vmem:[%s282 + $0x60] sm:$0xff]
        %v769 = vld [vmem:[%s282 + $0x68] sm:$0xff]
        %v770 = vld [vmem:[%s282 + $0x70] sm:$0xff]
        %v771 = vld [vmem:[%s282 + $0x78] sm:$0xff]
        %v772 = vld [vmem:[%s282 + $0x80] sm:$0xff]
        %v773 = vld [vmem:[%s282 + $0x88] sm:$0xff]
        %v774 = vld [vmem:[%s282 + $0x90] sm:$0xff]
        %v775 = vld [vmem:[%s282 + $0x98] sm:$0xff]
        %v776 = vld [vmem:[%s282 + $0xa0] sm:$0xff]
        %v777 = vld [vmem:[%s282 + $0xa8] sm:$0xff]
        %v778 = vld [vmem:[%s282 + $0xb0] sm:$0xff]
        %v779 = vld [vmem:[%s282 + $0xb8] sm:$0xff]
        %v780 = vld [vmem:[%s282 + $0xc0] sm:$0xff]
        %v781 = vld [vmem:[%s282 + $0xc8] sm:$0xff]
        %v782 = vld [vmem:[%s282 + $0xd0] sm:$0xff]
        %v783 = vld [vmem:[%s282 + $0xd8] sm:$0xff]
        %v784 = vld [vmem:[%s282 + $0xe0] sm:$0xff]
        %v785 = vld [vmem:[%s282 + $0xe8] sm:$0xff]
        %v786 = vld [vmem:[%s282 + $0xf0] sm:$0xff]
        %v787 = vld [vmem:[%s282 + $0xf8] sm:$0xff]
        %s788 = smul.u32 0, 4
        %s789 = smul.addr %s788, 8
        %s790 = scalar_lea.vmem [#allocation2], %s789
        %v791 = vld [vmem:[%s790] sm:$0xff]
        %v792 = vld [vmem:[%s790 + $0x8] sm:$0xff]
        %v793 = vld [vmem:[%s790 + $0x10] sm:$0xff]
        %v794 = vld [vmem:[%s790 + $0x18] sm:$0xff]
        %v827 = vunpack.c.l.b16 %v756
        %v828 = vunpack.c.h.b16 %v756
        %v829 = vunpack.c.l.b16 %v757
        %v830 = vunpack.c.h.b16 %v757
        %v831 = vunpack.c.l.b16 %v758
        %v832 = vunpack.c.h.b16 %v758
        %v833 = vunpack.c.l.b16 %v759
        %v834 = vunpack.c.h.b16 %v759
        %v835 = vunpack.c.l.b16 %v760
        %v836 = vunpack.c.h.b16 %v760
        %v837 = vunpack.c.l.b16 %v761
        %v838 = vunpack.c.h.b16 %v761
        %v839 = vunpack.c.l.b16 %v762
        %v840 = vunpack.c.h.b16 %v762
        %v841 = vunpack.c.l.b16 %v763
        %v842 = vunpack.c.h.b16 %v763
        %v843 = vunpack.c.l.b16 %v764
        %v844 = vunpack.c.h.b16 %v764
        %v845 = vunpack.c.l.b16 %v765
        %v846 = vunpack.c.h.b16 %v765
        %v847 = vunpack.c.l.b16 %v766
        %v848 = vunpack.c.h.b16 %v766
        %v849 = vunpack.c.l.b16 %v767
        %v850 = vunpack.c.h.b16 %v767
        %v851 = vunpack.c.l.b16 %v768
        %v852 = vunpack.c.h.b16 %v768
        %v853 = vunpack.c.l.b16 %v769
        %v854 = vunpack.c.h.b16 %v769
        %v855 = vunpack.c.l.b16 %v770
        %v856 = vunpack.c.h.b16 %v770
        %v857 = vunpack.c.l.b16 %v771
        %v858 = vunpack.c.h.b16 %v771
        %v859 = vunpack.c.l.b16 %v772
        %v860 = vunpack.c.h.b16 %v772
        %v861 = vunpack.c.l.b16 %v773
        %v862 = vunpack.c.h.b16 %v773
        %v863 = vunpack.c.l.b16 %v774
        %v864 = vunpack.c.h.b16 %v774
        %v865 = vunpack.c.l.b16 %v775
        %v866 = vunpack.c.h.b16 %v775
        %v867 = vunpack.c.l.b16 %v776
        %v868 = vunpack.c.h.b16 %v776
        %v869 = vunpack.c.l.b16 %v777
        %v870 = vunpack.c.h.b16 %v777
        %v871 = vunpack.c.l.b16 %v778
        %v872 = vunpack.c.h.b16 %v778
        %v873 = vunpack.c.l.b16 %v779
        %v874 = vunpack.c.h.b16 %v779
        %v875 = vunpack.c.l.b16 %v780
        %v876 = vunpack.c.h.b16 %v780
        %v877 = vunpack.c.l.b16 %v781
        %v878 = vunpack.c.h.b16 %v781
        %v879 = vunpack.c.l.b16 %v782
        %v880 = vunpack.c.h.b16 %v782
        %v881 = vunpack.c.l.b16 %v783
        %v882 = vunpack.c.h.b16 %v783
        %v883 = vunpack.c.l.b16 %v784
        %v884 = vunpack.c.h.b16 %v784
        %v885 = vunpack.c.l.b16 %v785
        %v886 = vunpack.c.h.b16 %v785
        %v887 = vunpack.c.l.b16 %v786
        %v888 = vunpack.c.h.b16 %v786
        %v889 = vunpack.c.l.b16 %v787
        %v890 = vunpack.c.h.b16 %v787
        %v891 = vpack.c.b16 %v831, %v827
        %v892 = vpack.c.b16 %v832, %v828
        %v893 = vpack.c.b16 %v833, %v829
        %v894 = vpack.c.b16 %v834, %v830
        %v895 = vpack.c.b16 %v839, %v835
        %v896 = vpack.c.b16 %v840, %v836
        %v897 = vpack.c.b16 %v841, %v837
        %v898 = vpack.c.b16 %v842, %v838
        %v899 = vpack.c.b16 %v847, %v843
        %v900 = vpack.c.b16 %v848, %v844
        %v901 = vpack.c.b16 %v849, %v845
        %v902 = vpack.c.b16 %v850, %v846
        %v903 = vpack.c.b16 %v855, %v851
        %v904 = vpack.c.b16 %v856, %v852
        %v905 = vpack.c.b16 %v857, %v853
        %v906 = vpack.c.b16 %v858, %v854
        %v907 = vpack.c.b16 %v863, %v859
        %v908 = vpack.c.b16 %v864, %v860
        %v909 = vpack.c.b16 %v865, %v861
        %v910 = vpack.c.b16 %v866, %v862
        %v911 = vpack.c.b16 %v871, %v867
        %v912 = vpack.c.b16 %v872, %v868
        %v913 = vpack.c.b16 %v873, %v869
        %v914 = vpack.c.b16 %v874, %v870
        %v915 = vpack.c.b16 %v879, %v875
        %v916 = vpack.c.b16 %v880, %v876
        %v917 = vpack.c.b16 %v881, %v877
        %v918 = vpack.c.b16 %v882, %v878
        %v919 = vpack.c.b16 %v887, %v883
        %v920 = vpack.c.b16 %v888, %v884
        %v921 = vpack.c.b16 %v889, %v885
        %v922 = vpack.c.b16 %v890, %v886
        %955 = vmatprep.subr.bf16.mxu0 %v892
        %956 = vmatpush1.bf16.msra.mxu0 %v891
        %957 = vmatprep.subr.bf16.mxu0 %v896
        %958 = vmatpush1.bf16.msra.mxu0 %v895
        %959 = vmatprep.subr.bf16.mxu0 %v900
        %960 = vmatpush1.bf16.msra.mxu0 %v899
        %961 = vmatprep.subr.bf16.mxu0 %v904
        %962 = vmatpush1.bf16.msra.mxu0 %v903
        %963 = vmatprep.subr.bf16.mxu0 %v908
        %964 = vmatpush1.bf16.msra.mxu0 %v907
        %965 = vmatprep.subr.bf16.mxu0 %v912
        %966 = vmatpush1.bf16.msra.mxu0 %v911
        %967 = vmatprep.subr.bf16.mxu0 %v916
        %968 = vmatpush1.bf16.msra.mxu0 %v915
        %969 = vmatprep.subr.bf16.mxu0 %v920
        %970 = vmatpush1.bf16.msra.mxu0 %v919
        %971 = vmatprep.subr.bf16.mxu0 0
        %972 = vmatpush1.bf16.msra.mxu0 0
        %973 = vmatprep.subr.bf16.mxu0 0
        %974 = vmatpush1.bf16.msra.mxu0 0
        %975 = vmatprep.subr.bf16.mxu0 0
        %976 = vmatpush1.bf16.msra.mxu0 0
        %977 = vmatprep.subr.bf16.mxu0 0
        %978 = vmatpush1.bf16.msra.mxu0 0
        %979 = vmatprep.subr.bf16.mxu0 0
        %980 = vmatpush1.bf16.msra.mxu0 0
        %981 = vmatprep.subr.bf16.mxu0 0
        %982 = vmatpush1.bf16.msra.mxu0 0
        %983 = vmatprep.subr.bf16.mxu0 0
        %984 = vmatpush1.bf16.msra.mxu0 0
        %985 = vmatprep.subr.bf16.mxu0 0
        %986 = vmatpush1.bf16.msra.mxu0 0
        %987 = vmatprep.mubr.bf16.mxu0 0
        %988 = vmatmul.mubr.bf16.gmra.mrb[0].mxu0 0
        %v989 = vpop.f32.mrb[0].mxu0
        %v990 = vadd.f32 0.0, %v989
        %v991 = vpop.f32.mrb[0].mxu0
        %v992 = vadd.f32 0.0, %v991
        %v993 = vpop.f32.mrb[0].mxu0
        %v994 = vpop.f32.mrb[0].mxu0
        %995 = vdwg.mxu0
        %996 = vmatprep.subr.bf16.mxu0 %v894
        %997 = vmatpush1.bf16.msra.mxu0 %v893
        %998 = vmatprep.subr.bf16.mxu0 %v898
        %999 = vmatpush1.bf16.msra.mxu0 %v897
        %1000 = vmatprep.subr.bf16.mxu0 %v902
        %1001 = vmatpush1.bf16.msra.mxu0 %v901
        %1002 = vmatprep.subr.bf16.mxu0 %v906
        %1003 = vmatpush1.bf16.msra.mxu0 %v905
        %1004 = vmatprep.subr.bf16.mxu0 %v910
        %1005 = vmatpush1.bf16.msra.mxu0 %v909
        %1006 = vmatprep.subr.bf16.mxu0 %v914
        %1007 = vmatpush1.bf16.msra.mxu0 %v913
        %1008 = vmatprep.subr.bf16.mxu0 %v918
        %1009 = vmatpush1.bf16.msra.mxu0 %v917
        %1010 = vmatprep.subr.bf16.mxu0 %v922
        %1011 = vmatpush1.bf16.msra.mxu0 %v921
        %1012 = vmatprep.subr.bf16.mxu0 0
        %1013 = vmatpush1.bf16.msra.mxu0 0
        %1014 = vmatprep.subr.bf16.mxu0 0
        %1015 = vmatpush1.bf16.msra.mxu0 0
        %1016 = vmatprep.subr.bf16.mxu0 0
        %1017 = vmatpush1.bf16.msra.mxu0 0
        %1018 = vmatprep.subr.bf16.mxu0 0
        %1019 = vmatpush1.bf16.msra.mxu0 0
        %1020 = vmatprep.subr.bf16.mxu0 0
        %1021 = vmatpush1.bf16.msra.mxu0 0
        %1022 = vmatprep.subr.bf16.mxu0 0
        %1023 = vmatpush1.bf16.msra.mxu0 0
        %1024 = vmatprep.subr.bf16.mxu0 0
        %1025 = vmatpush1.bf16.msra.mxu0 0
        %1026 = vmatprep.subr.bf16.mxu0 0
        %1027 = vmatpush1.bf16.msra.mxu0 0
        %1028 = vmatprep.mubr.bf16.mxu0 0
        %1029 = vmatmul.mubr.bf16.gmra.mrb[0].mxu0 0
        %v1030 = vpop.f32.mrb[0].mxu0
        %v1031 = vadd.f32 0.0, %v1030
        %v1032 = vpop.f32.mrb[0].mxu0
        %v1033 = vadd.f32 0.0, %v1032
        %v1034 = vpop.f32.mrb[0].mxu0
        %v1035 = vpop.f32.mrb[0].mxu0
        %1036 = vdwg.mxu0
        %v1037 = vadd.f32 %v791, %v990
        %v1038 = vadd.f32 %v792, %v992
        %v1039 = vadd.f32 %v793, %v1031
        %v1040 = vadd.f32 %v794, %v1033
        %v1041 = vxor.u32 %v1037, 2147483648
        %v1042 = vmul.f32 %v1041, 1.442695
        %v1043 = vpow.pop %v1042
        %v1044 = vadd.f32 %v1043, 1.0
        %v1045 = vrcp.pop %v1044
        %v1046 = vmul.f32 1.0, %v1045
        %v1047 = vxor.u32 %v1038, 2147483648
        %v1048 = vmul.f32 %v1047, 1.442695
        %v1049 = vpow.pop %v1048
        %v1050 = vadd.f32 %v1049, 1.0
        %v1051 = vrcp.pop %v1050
        %v1052 = vmul.f32 1.0, %v1051
        %v1053 = vtanh.pop %v1039
        %v1054 = vmul.f32 %v1052, 0.0
        %v1055 = vmul.f32 %v1046, %v1053
        %v1056 = vadd.f32 %v1054, %v1055
        %v1057 = vtanh.pop %v1056
        %v1058 = vxor.u32 %v1040, 2147483648
        %v1059 = vmul.f32 %v1058, 1.442695
        %v1060 = vpow.pop %v1059
        %v1061 = vadd.f32 %v1060, 1.0
        %v1062 = vrcp.pop %v1061
        %v1063 = vmul.f32 1.0, %v1062
        %v1064 = vmul.f32 %v1063, %v1057
        %1065 = vst [vmem:[%s330] sm:$0xff] %v1064
        %s1066 = smul.u32 1, 4
        %s1067 = smul.addr %s1066, 8
        %s1068 = scalar_lea.vmem [#allocation2], %s1067
        %v1069 = vld [vmem:[%s1068] sm:$0xff]
        %v1070 = vld [vmem:[%s1068 + $0x8] sm:$0xff]
        %v1071 = vld [vmem:[%s1068 + $0x10] sm:$0xff]
        %v1072 = vld [vmem:[%s1068 + $0x18] sm:$0xff]
        %v1073 = vpack.c.bf16 %v1064, %v1064
        %1074 = vmatprep.subr.bf16.mxu0 %v892
        %1075 = vmatpush1.bf16.msra.mxu0 %v891
        %1076 = vmatprep.subr.bf16.mxu0 %v896
        %1077 = vmatpush1.bf16.msra.mxu0 %v895
        %1078 = vmatprep.subr.bf16.mxu0 %v900
        %1079 = vmatpush1.bf16.msra.mxu0 %v899
        %1080 = vmatprep.subr.bf16.mxu0 %v904
        %1081 = vmatpush1.bf16.msra.mxu0 %v903
        %1082 = vmatprep.subr.bf16.mxu0 %v908
        %1083 = vmatpush1.bf16.msra.mxu0 %v907
        %1084 = vmatprep.subr.bf16.mxu0 %v912
        %1085 = vmatpush1.bf16.msra.mxu0 %v911
        %1086 = vmatprep.subr.bf16.mxu0 %v916
        %1087 = vmatpush1.bf16.msra.mxu0 %v915
        %1088 = vmatprep.subr.bf16.mxu0 %v920
        %1089 = vmatpush1.bf16.msra.mxu0 %v919
        %1090 = vmatprep.subr.bf16.mxu0 0
        %1091 = vmatpush1.bf16.msra.mxu0 0
        %1092 = vmatprep.subr.bf16.mxu0 0
        %1093 = vmatpush1.bf16.msra.mxu0 0
        %1094 = vmatprep.subr.bf16.mxu0 0
        %1095 = vmatpush1.bf16.msra.mxu0 0
        %1096 = vmatprep.subr.bf16.mxu0 0
        %1097 = vmatpush1.bf16.msra.mxu0 0
        %1098 = vmatprep.subr.bf16.mxu0 0
        %1099 = vmatpush1.bf16.msra.mxu0 0
        %1100 = vmatprep.subr.bf16.mxu0 0
        %1101 = vmatpush1.bf16.msra.mxu0 0
        %1102 = vmatprep.subr.bf16.mxu0 0
        %1103 = vmatpush1.bf16.msra.mxu0 0
        %1104 = vmatprep.subr.bf16.mxu0 0
        %1105 = vmatpush1.bf16.msra.mxu0 0
        %1106 = vmatprep.mubr.bf16.mxu0 0
        %1107 = vmatmul.mubr.bf16.gmra.mrb[0].mxu0 %v1073
        %v1108 = vpop.f32.mrb[0].mxu0
        %v1109 = vadd.f32 0.0, %v1108
        %v1110 = vpop.f32.mrb[0].mxu0
        %v1111 = vadd.f32 0.0, %v1110
        %v1112 = vpop.f32.mrb[0].mxu0
        %v1113 = vpop.f32.mrb[0].mxu0
        %1114 = vdwg.mxu0
        %1115 = vmatprep.subr.bf16.mxu0 %v894
        %1116 = vmatpush1.bf16.msra.mxu0 %v893
        %1117 = vmatprep.subr.bf16.mxu0 %v898
        %1118 = vmatpush1.bf16.msra.mxu0 %v897
        %1119 = vmatprep.subr.bf16.mxu0 %v902
        %1120 = vmatpush1.bf16.msra.mxu0 %v901
        %1121 = vmatprep.subr.bf16.mxu0 %v906
        %1122 = vmatpush1.bf16.msra.mxu0 %v905
        %1123 = vmatprep.subr.bf16.mxu0 %v910
        %1124 = vmatpush1.bf16.msra.mxu0 %v909
        %1125 = vmatprep.subr.bf16.mxu0 %v914
        %1126 = vmatpush1.bf16.msra.mxu0 %v913
        %1127 = vmatprep.subr.bf16.mxu0 %v918
        %1128 = vmatpush1.bf16.msra.mxu0 %v917
        %1129 = vmatprep.subr.bf16.mxu0 %v922
        %1130 = vmatpush1.bf16.msra.mxu0 %v921
        %1131 = vmatprep.subr.bf16.mxu0 0
        %1132 = vmatpush1.bf16.msra.mxu0 0
        %1133 = vmatprep.subr.bf16.mxu0 0
        %1134 = vmatpush1.bf16.msra.mxu0 0
        %1135 = vmatprep.subr.bf16.mxu0 0
        %1136 = vmatpush1.bf16.msra.mxu0 0
        %1137 = vmatprep.subr.bf16.mxu0 0
        %1138 = vmatpush1.bf16.msra.mxu0 0
        %1139 = vmatprep.subr.bf16.mxu0 0
        %1140 = vmatpush1.bf16.msra.mxu0 0
        %1141 = vmatprep.subr.bf16.mxu0 0
        %1142 = vmatpush1.bf16.msra.mxu0 0
        %1143 = vmatprep.subr.bf16.mxu0 0
        %1144 = vmatpush1.bf16.msra.mxu0 0
        %1145 = vmatprep.subr.bf16.mxu0 0
        %1146 = vmatpush1.bf16.msra.mxu0 0
        %1147 = vmatprep.mubr.bf16.mxu0 0
        %1148 = vmatmul.mubr.bf16.gmra.mrb[0].mxu0 %v1073
        %v1149 = vpop.f32.mrb[0].mxu0
        %v1150 = vadd.f32 0.0, %v1149
        %v1151 = vpop.f32.mrb[0].mxu0
        %v1152 = vadd.f32 0.0, %v1151
        %v1153 = vpop.f32.mrb[0].mxu0
        %v1154 = vpop.f32.mrb[0].mxu0
        %1155 = vdwg.mxu0
        %v1156 = vadd.f32 %v1069, %v1109
        %v1157 = vadd.f32 %v1070, %v1111
        %v1158 = vadd.f32 %v1071, %v1150
        %v1159 = vadd.f32 %v1072, %v1152
        %v1160 = vxor.u32 %v1156, 2147483648
        %v1161 = vmul.f32 %v1160, 1.442695
        %v1162 = vpow.pop %v1161
        %v1163 = vadd.f32 %v1162, 1.0
        %v1164 = vrcp.pop %v1163
        %v1165 = vmul.f32 1.0, %v1164
        %v1166 = vxor.u32 %v1157, 2147483648
        %v1167 = vmul.f32 %v1166, 1.442695
        %v1168 = vpow.pop %v1167
        %v1169 = vadd.f32 %v1168, 1.0
        %v1170 = vrcp.pop %v1169
        %v1171 = vmul.f32 1.0, %v1170
        %v1172 = vtanh.pop %v1158
        %v1173 = vmul.f32 %v1171, %v1056
        %v1174 = vmul.f32 %v1165, %v1172
        %v1175 = vadd.f32 %v1173, %v1174
        %v1176 = vtanh.pop %v1175
        %v1177 = vxor.u32 %v1159, 2147483648
        %v1178 = vmul.f32 %v1177, 1.442695
        %v1179 = vpow.pop %v1178
        %v1180 = vadd.f32 %v1179, 1.0
        %v1181 = vrcp.pop %v1180
        %v1182 = vmul.f32 1.0, %v1181
        %v1183 = vmul.f32 %v1182, %v1176
        %s1184 = scalar_lea.vmem %s330, 8 [#allocation11]
        %1185 = vst [vmem:[%s1184] sm:$0xff] %v1183
        %s1186 = smul.u32 2, 4
        %s1187 = smul.addr %s1186, 8
        %s1188 = scalar_lea.vmem [#allocation2], %s1187
        %v1189 = vld [vmem:[%s1188] sm:$0xff]
        %v1190 = vld [vmem:[%s1188 + $0x8] sm:$0xff]
        %v1191 = vld [vmem:[%s1188 + $0x10] sm:$0xff]
        %v1192 = vld [vmem:[%s1188 + $0x18] sm:$0xff]
        %v1193 = vpack.c.bf16 %v1183, %v1183
        %1194 = vmatprep.subr.bf16.mxu0 %v892
        %1195 = vmatpush1.bf16.msra.mxu0 %v891
        %1196 = vmatprep.subr.bf16.mxu0 %v896
        %1197 = vmatpush1.bf16.msra.mxu0 %v895
        %1198 = vmatprep.subr.bf16.mxu0 %v900
        %1199 = vmatpush1.bf16.msra.mxu0 %v899
        %1200 = vmatprep.subr.bf16.mxu0 %v904
        %1201 = vmatpush1.bf16.msra.mxu0 %v903
        %1202 = vmatprep.subr.bf16.mxu0 %v908
        %1203 = vmatpush1.bf16.msra.mxu0 %v907
        %1204 = vmatprep.subr.bf16.mxu0 %v912
        %1205 = vmatpush1.bf16.msra.mxu0 %v911
        %1206 = vmatprep.subr.bf16.mxu0 %v916
        %1207 = vmatpush1.bf16.msra.mxu0 %v915
        %1208 = vmatprep.subr.bf16.mxu0 %v920
        %1209 = vmatpush1.bf16.msra.mxu0 %v919
        %1210 = vmatprep.subr.bf16.mxu0 0
        %1211 = vmatpush1.bf16.msra.mxu0 0
        %1212 = vmatprep.subr.bf16.mxu0 0
        %1213 = vmatpush1.bf16.msra.mxu0 0
        %1214 = vmatprep.subr.bf16.mxu0 0
        %1215 = vmatpush1.bf16.msra.mxu0 0
        %1216 = vmatprep.subr.bf16.mxu0 0
        %1217 = vmatpush1.bf16.msra.mxu0 0
        %1218 = vmatprep.subr.bf16.mxu0 0
        %1219 = vmatpush1.bf16.msra.mxu0 0
        %1220 = vmatprep.subr.bf16.mxu0 0
        %1221 = vmatpush1.bf16.msra.mxu0 0
        %1222 = vmatprep.subr.bf16.mxu0 0
        %1223 = vmatpush1.bf16.msra.mxu0 0
        %1224 = vmatprep.subr.bf16.mxu0 0
        %1225 = vmatpush1.bf16.msra.mxu0 0
        %1226 = vmatprep.mubr.bf16.mxu0 0
        %1227 = vmatmul.mubr.bf16.gmra.mrb[0].mxu0 %v1193
        %v1228 = vpop.f32.mrb[0].mxu0
        %v1229 = vadd.f32 0.0, %v1228
        %v1230 = vpop.f32.mrb[0].mxu0
        %v1231 = vadd.f32 0.0, %v1230
        %v1232 = vpop.f32.mrb[0].mxu0
        %v1233 = vpop.f32.mrb[0].mxu0
        %1234 = vdwg.mxu0
        %1235 = vmatprep.subr.bf16.mxu0 %v894
        %1236 = vmatpush1.bf16.msra.mxu0 %v893
        %1237 = vmatprep.subr.bf16.mxu0 %v898
        %1238 = vmatpush1.bf16.msra.mxu0 %v897
        %1239 = vmatprep.subr.bf16.mxu0 %v902
        %1240 = vmatpush1.bf16.msra.mxu0 %v901
        %1241 = vmatprep.subr.bf16.mxu0 %v906
        %1242 = vmatpush1.bf16.msra.mxu0 %v905
        %1243 = vmatprep.subr.bf16.mxu0 %v910
        %1244 = vmatpush1.bf16.msra.mxu0 %v909
        %1245 = vmatprep.subr.bf16.mxu0 %v914
        %1246 = vmatpush1.bf16.msra.mxu0 %v913
        %1247 = vmatprep.subr.bf16.mxu0 %v918
        %1248 = vmatpush1.bf16.msra.mxu0 %v917
        %1249 = vmatprep.subr.bf16.mxu0 %v922
        %1250 = vmatpush1.bf16.msra.mxu0 %v921
        %1251 = vmatprep.subr.bf16.mxu0 0
        %1252 = vmatpush1.bf16.msra.mxu0 0
        %1253 = vmatprep.subr.bf16.mxu0 0
        %1254 = vmatpush1.bf16.msra.mxu0 0
        %1255 = vmatprep.subr.bf16.mxu0 0
        %1256 = vmatpush1.bf16.msra.mxu0 0
        %1257 = vmatprep.subr.bf16.mxu0 0
        %1258 = vmatpush1.bf16.msra.mxu0 0
        %1259 = vmatprep.subr.bf16.mxu0 0
        %1260 = vmatpush1.bf16.msra.mxu0 0
        %1261 = vmatprep.subr.bf16.mxu0 0
        %1262 = vmatpush1.bf16.msra.mxu0 0
        %1263 = vmatprep.subr.bf16.mxu0 0
        %1264 = vmatpush1.bf16.msra.mxu0 0
        %1265 = vmatprep.subr.bf16.mxu0 0
        %1266 = vmatpush1.bf16.msra.mxu0 0
        %1267 = vmatprep.mubr.bf16.mxu0 0
        %1268 = vmatmul.mubr.bf16.gmra.mrb[0].mxu0 %v1193
        %v1269 = vpop.f32.mrb[0].mxu0
        %v1270 = vadd.f32 0.0, %v1269
        %v1271 = vpop.f32.mrb[0].mxu0
        %v1272 = vadd.f32 0.0, %v1271
        %v1273 = vpop.f32.mrb[0].mxu0
        %v1274 = vpop.f32.mrb[0].mxu0
        %1275 = vdwg.mxu0
        %v1276 = vadd.f32 %v1189, %v1229
        %v1277 = vadd.f32 %v1190, %v1231
        %v1278 = vadd.f32 %v1191, %v1270
        %v1279 = vadd.f32 %v1192, %v1272
        %v1280 = vxor.u32 %v1276, 2147483648
        %v1281 = vmul.f32 %v1280, 1.442695
        %v1282 = vpow.pop %v1281
        %v1283 = vadd.f32 %v1282, 1.0
        %v1284 = vrcp.pop %v1283
        %v1285 = vmul.f32 1.0, %v1284
        %v1286 = vxor.u32 %v1277, 2147483648
        %v1287 = vmul.f32 %v1286, 1.442695
        %v1288 = vpow.pop %v1287
        %v1289 = vadd.f32 %v1288, 1.0
        %v1290 = vrcp.pop %v1289
        %v1291 = vmul.f32 1.0, %v1290
        %v1292 = vtanh.pop %v1278
        %v1293 = vmul.f32 %v1291, %v1175
        %v1294 = vmul.f32 %v1285, %v1292
        %v1295 = vadd.f32 %v1293, %v1294
        %v1296 = vtanh.pop %v1295
        %v1297 = vxor.u32 %v1279, 2147483648
        %v1298 = vmul.f32 %v1297, 1.442695
        %v1299 = vpow.pop %v1298
        %v1300 = vadd.f32 %v1299, 1.0
        %v1301 = vrcp.pop %v1300
        %v1302 = vmul.f32 1.0, %v1301
        %v1303 = vmul.f32 %v1302, %v1296
        %s1304 = scalar_lea.vmem %s330, 16 [#allocation11]
        %1305 = vst [vmem:[%s1304] sm:$0xff] %v1303
        %s1306 = smul.u32 3, 4
        %s1307 = smul.addr %s1306, 8
        %s1308 = scalar_lea.vmem [#allocation2], %s1307
        %v1309 = vld [vmem:[%s1308] sm:$0xff]
        %v1310 = vld [vmem:[%s1308 + $0x8] sm:$0xff]
        %v1311 = vld [vmem:[%s1308 + $0x10] sm:$0xff]
        %v1312 = vld [vmem:[%s1308 + $0x18] sm:$0xff]
        %v1313 = vpack.c.bf16 %v1303, %v1303
        %1314 = vmatprep.subr.bf16.mxu0 %v892
        %1315 = vmatpush1.bf16.msra.mxu0 %v891
        %1316 = vmatprep.subr.bf16.mxu0 %v896
        %1317 = vmatpush1.bf16.msra.mxu0 %v895
        %1318 = vmatprep.subr.bf16.mxu0 %v900
        %1319 = vmatpush1.bf16.msra.mxu0 %v899
        %1320 = vmatprep.subr.bf16.mxu0 %v904
        %1321 = vmatpush1.bf16.msra.mxu0 %v903
        %1322 = vmatprep.subr.bf16.mxu0 %v908
        %1323 = vmatpush1.bf16.msra.mxu0 %v907
        %1324 = vmatprep.subr.bf16.mxu0 %v912
        %1325 = vmatpush1.bf16.msra.mxu0 %v911
        %1326 = vmatprep.subr.bf16.mxu0 %v916
        %1327 = vmatpush1.bf16.msra.mxu0 %v915
        %1328 = vmatprep.subr.bf16.mxu0 %v920
        %1329 = vmatpush1.bf16.msra.mxu0 %v919
        %1330 = vmatprep.subr.bf16.mxu0 0
        %1331 = vmatpush1.bf16.msra.mxu0 0
        %1332 = vmatprep.subr.bf16.mxu0 0
        %1333 = vmatpush1.bf16.msra.mxu0 0
        %1334 = vmatprep.subr.bf16.mxu0 0
        %1335 = vmatpush1.bf16.msra.mxu0 0
        %1336 = vmatprep.subr.bf16.mxu0 0
        %1337 = vmatpush1.bf16.msra.mxu0 0
        %1338 = vmatprep.subr.bf16.mxu0 0
        %1339 = vmatpush1.bf16.msra.mxu0 0
        %1340 = vmatprep.subr.bf16.mxu0 0
        %1341 = vmatpush1.bf16.msra.mxu0 0
        %1342 = vmatprep.subr.bf16.mxu0 0
        %1343 = vmatpush1.bf16.msra.mxu0 0
        %1344 = vmatprep.subr.bf16.mxu0 0
        %1345 = vmatpush1.bf16.msra.mxu0 0
        %1346 = vmatprep.mubr.bf16.mxu0 0
        %1347 = vmatmul.mubr.bf16.gmra.mrb[0].mxu0 %v1313
        %v1348 = vpop.f32.mrb[0].mxu0
        %v1349 = vadd.f32 0.0, %v1348
        %v1350 = vpop.f32.mrb[0].mxu0
        %v1351 = vadd.f32 0.0, %v1350
        %v1352 = vpop.f32.mrb[0].mxu0
        %v1353 = vpop.f32.mrb[0].mxu0
        %1354 = vdwg.mxu0
        %1355 = vmatprep.subr.bf16.mxu0 %v894
        %1356 = vmatpush1.bf16.msra.mxu0 %v893
        %1357 = vmatprep.subr.bf16.mxu0 %v898
        %1358 = vmatpush1.bf16.msra.mxu0 %v897
        %1359 = vmatprep.subr.bf16.mxu0 %v902
        %1360 = vmatpush1.bf16.msra.mxu0 %v901
        %1361 = vmatprep.subr.bf16.mxu0 %v906
        %1362 = vmatpush1.bf16.msra.mxu0 %v905
        %1363 = vmatprep.subr.bf16.mxu0 %v910
        %1364 = vmatpush1.bf16.msra.mxu0 %v909
        %1365 = vmatprep.subr.bf16.mxu0 %v914
        %1366 = vmatpush1.bf16.msra.mxu0 %v913
        %1367 = vmatprep.subr.bf16.mxu0 %v918
        %1368 = vmatpush1.bf16.msra.mxu0 %v917
        %1369 = vmatprep.subr.bf16.mxu0 %v922
        %1370 = vmatpush1.bf16.msra.mxu0 %v921
        %1371 = vmatprep.subr.bf16.mxu0 0
        %1372 = vmatpush1.bf16.msra.mxu0 0
        %1373 = vmatprep.subr.bf16.mxu0 0
        %1374 = vmatpush1.bf16.msra.mxu0 0
        %1375 = vmatprep.subr.bf16.mxu0 0
        %1376 = vmatpush1.bf16.msra.mxu0 0
        %1377 = vmatprep.subr.bf16.mxu0 0
        %1378 = vmatpush1.bf16.msra.mxu0 0
        %1379 = vmatprep.subr.bf16.mxu0 0
        %1380 = vmatpush1.bf16.msra.mxu0 0
        %1381 = vmatprep.subr.bf16.mxu0 0
        %1382 = vmatpush1.bf16.msra.mxu0 0
        %1383 = vmatprep.subr.bf16.mxu0 0
        %1384 = vmatpush1.bf16.msra.mxu0 0
        %1385 = vmatprep.subr.bf16.mxu0 0
        %1386 = vmatpush1.bf16.msra.mxu0 0
        %1387 = vmatprep.mubr.bf16.mxu0 0
        %1388 = vmatmul.mubr.bf16.gmra.mrb[0].mxu0 %v1313
        %v1389 = vpop.f32.mrb[0].mxu0
        %v1390 = vadd.f32 0.0, %v1389
        %v1391 = vpop.f32.mrb[0].mxu0
        %v1392 = vadd.f32 0.0, %v1391
        %v1393 = vpop.f32.mrb[0].mxu0
        %v1394 = vpop.f32.mrb[0].mxu0
        %1395 = vdwg.mxu0
        %v1396 = vadd.f32 %v1309, %v1349
        %v1397 = vadd.f32 %v1310, %v1351
        %v1398 = vadd.f32 %v1311, %v1390
        %v1399 = vadd.f32 %v1312, %v1392
        %v1400 = vxor.u32 %v1396, 2147483648
        %v1401 = vmul.f32 %v1400, 1.442695
        %v1402 = vpow.pop %v1401
        %v1403 = vadd.f32 %v1402, 1.0
        %v1404 = vrcp.pop %v1403
        %v1405 = vmul.f32 1.0, %v1404
        %v1406 = vxor.u32 %v1397, 2147483648
        %v1407 = vmul.f32 %v1406, 1.442695
        %v1408 = vpow.pop %v1407
        %v1409 = vadd.f32 %v1408, 1.0
        %v1410 = vrcp.pop %v1409
        %v1411 = vmul.f32 1.0, %v1410
        %v1412 = vtanh.pop %v1398
        %v1413 = vmul.f32 %v1411, %v1295
        %v1414 = vmul.f32 %v1405, %v1412
        %v1415 = vadd.f32 %v1413, %v1414
        %v1416 = vtanh.pop %v1415
        %v1417 = vxor.u32 %v1399, 2147483648
        %v1418 = vmul.f32 %v1417, 1.442695
        %v1419 = vpow.pop %v1418
        %v1420 = vadd.f32 %v1419, 1.0
        %v1421 = vrcp.pop %v1420
        %v1422 = vmul.f32 1.0, %v1421
        %v1423 = vmul.f32 %v1422, %v1416
        %s1424 = scalar_lea.vmem %s330, 24 [#allocation11]
        %1425 = vst [vmem:[%s1424] sm:$0xff] %v1423
        %s1426 = smul.u32 4, 4
        %s1427 = smul.addr %s1426, 8
        %s1428 = scalar_lea.vmem [#allocation2], %s1427
        %v1429 = vld [vmem:[%s1428] sm:$0xff]
        %v1430 = vld [vmem:[%s1428 + $0x8] sm:$0xff]
        %v1431 = vld [vmem:[%s1428 + $0x10] sm:$0xff]
        %v1432 = vld [vmem:[%s1428 + $0x18] sm:$0xff]
        %v1433 = vpack.c.bf16 %v1423, %v1423
        %1434 = vmatprep.subr.bf16.mxu0 %v892
        %1435 = vmatpush1.bf16.msra.mxu0 %v891
        %1436 = vmatprep.subr.bf16.mxu0 %v896
        %1437 = vmatpush1.bf16.msra.mxu0 %v895
        %1438 = vmatprep.subr.bf16.mxu0 %v900
        %1439 = vmatpush1.bf16.msra.mxu0 %v899
        %1440 = vmatprep.subr.bf16.mxu0 %v904
        %1441 = vmatpush1.bf16.msra.mxu0 %v903
        %1442 = vmatprep.subr.bf16.mxu0 %v908
        %1443 = vmatpush1.bf16.msra.mxu0 %v907
        %1444 = vmatprep.subr.bf16.mxu0 %v912
        %1445 = vmatpush1.bf16.msra.mxu0 %v911
        %1446 = vmatprep.subr.bf16.mxu0 %v916
        %1447 = vmatpush1.bf16.msra.mxu0 %v915
        %1448 = vmatprep.subr.bf16.mxu0 %v920
        %1449 = vmatpush1.bf16.msra.mxu0 %v919
        %1450 = vmatprep.subr.bf16.mxu0 0
        %1451 = vmatpush1.bf16.msra.mxu0 0
        %1452 = vmatprep.subr.bf16.mxu0 0
        %1453 = vmatpush1.bf16.msra.mxu0 0
        %1454 = vmatprep.subr.bf16.mxu0 0
        %1455 = vmatpush1.bf16.msra.mxu0 0
        %1456 = vmatprep.subr.bf16.mxu0 0
        %1457 = vmatpush1.bf16.msra.mxu0 0
        %1458 = vmatprep.subr.bf16.mxu0 0
        %1459 = vmatpush1.bf16.msra.mxu0 0
        %1460 = vmatprep.subr.bf16.mxu0 0
        %1461 = vmatpush1.bf16.msra.mxu0 0
        %1462 = vmatprep.subr.bf16.mxu0 0
        %1463 = vmatpush1.bf16.msra.mxu0 0
        %1464 = vmatprep.subr.bf16.mxu0 0
        %1465 = vmatpush1.bf16.msra.mxu0 0
        %1466 = vmatprep.mubr.bf16.mxu0 0
        %1467 = vmatmul.mubr.bf16.gmra.mrb[0].mxu0 %v1433
        %v1468 = vpop.f32.mrb[0].mxu0
        %v1469 = vadd.f32 0.0, %v1468
        %v1470 = vpop.f32.mrb[0].mxu0
        %v1471 = vadd.f32 0.0, %v1470
        %v1472 = vpop.f32.mrb[0].mxu0
        %v1473 = vpop.f32.mrb[0].mxu0
        %1474 = vdwg.mxu0
        %1475 = vmatprep.subr.bf16.mxu0 %v894
        %1476 = vmatpush1.bf16.msra.mxu0 %v893
        %1477 = vmatprep.subr.bf16.mxu0 %v898
        %1478 = vmatpush1.bf16.msra.mxu0 %v897
        %1479 = vmatprep.subr.bf16.mxu0 %v902
        %1480 = vmatpush1.bf16.msra.mxu0 %v901
        %1481 = vmatprep.subr.bf16.mxu0 %v906
        %1482 = vmatpush1.bf16.msra.mxu0 %v905
        %1483 = vmatprep.subr.bf16.mxu0 %v910
        %1484 = vmatpush1.bf16.msra.mxu0 %v909
        %1485 = vmatprep.subr.bf16.mxu0 %v914
        %1486 = vmatpush1.bf16.msra.mxu0 %v913
        %1487 = vmatprep.subr.bf16.mxu0 %v918
        %1488 = vmatpush1.bf16.msra.mxu0 %v917
        %1489 = vmatprep.subr.bf16.mxu0 %v922
        %1490 = vmatpush1.bf16.msra.mxu0 %v921
        %1491 = vmatprep.subr.bf16.mxu0 0
        %1492 = vmatpush1.bf16.msra.mxu0 0
        %1493 = vmatprep.subr.bf16.mxu0 0
        %1494 = vmatpush1.bf16.msra.mxu0 0
        %1495 = vmatprep.subr.bf16.mxu0 0
        %1496 = vmatpush1.bf16.msra.mxu0 0
        %1497 = vmatprep.subr.bf16.mxu0 0
        %1498 = vmatpush1.bf16.msra.mxu0 0
        %1499 = vmatprep.subr.bf16.mxu0 0
        %1500 = vmatpush1.bf16.msra.mxu0 0
        %1501 = vmatprep.subr.bf16.mxu0 0
        %1502 = vmatpush1.bf16.msra.mxu0 0
        %1503 = vmatprep.subr.bf16.mxu0 0
        %1504 = vmatpush1.bf16.msra.mxu0 0
        %1505 = vmatprep.subr.bf16.mxu0 0
        %1506 = vmatpush1.bf16.msra.mxu0 0
        %1507 = vmatprep.mubr.bf16.mxu0 0
        %1508 = vmatmul.mubr.bf16.gmra.mrb[0].mxu0 %v1433
        %v1509 = vpop.f32.mrb[0].mxu0
        %v1510 = vadd.f32 0.0, %v1509
        %v1511 = vpop.f32.mrb[0].mxu0
        %v1512 = vadd.f32 0.0, %v1511
        %v1513 = vpop.f32.mrb[0].mxu0
        %v1514 = vpop.f32.mrb[0].mxu0
        %1515 = vdwg.mxu0
        %v1516 = vadd.f32 %v1429, %v1469
        %v1517 = vadd.f32 %v1430, %v1471
        %v1518 = vadd.f32 %v1431, %v1510
        %v1519 = vadd.f32 %v1432, %v1512
        %v1520 = vxor.u32 %v1516, 2147483648
        %v1521 = vmul.f32 %v1520, 1.442695
        %v1522 = vpow.pop %v1521
        %v1523 = vadd.f32 %v1522, 1.0
        %v1524 = vrcp.pop %v1523
        %v1525 = vmul.f32 1.0, %v1524
        %v1526 = vxor.u32 %v1517, 2147483648
        %v1527 = vmul.f32 %v1526, 1.442695
        %v1528 = vpow.pop %v1527
        %v1529 = vadd.f32 %v1528, 1.0
        %v1530 = vrcp.pop %v1529
        %v1531 = vmul.f32 1.0, %v1530
        %v1532 = vtanh.pop %v1518
        %v1533 = vmul.f32 %v1531, %v1415
        %v1534 = vmul.f32 %v1525, %v1532
        %v1535 = vadd.f32 %v1533, %v1534
        %v1536 = vtanh.pop %v1535
        %v1537 = vxor.u32 %v1519, 2147483648
        %v1538 = vmul.f32 %v1537, 1.442695
        %v1539 = vpow.pop %v1538
        %v1540 = vadd.f32 %v1539, 1.0
        %v1541 = vrcp.pop %v1540
        %v1542 = vmul.f32 1.0, %v1541
        %v1543 = vmul.f32 %v1542, %v1536
        %s1544 = scalar_lea.vmem %s330, 32 [#allocation11]
        %1545 = vst [vmem:[%s1544] sm:$0xff] %v1543
        %s1546 = smul.u32 5, 4
        %s1547 = smul.addr %s1546, 8
        %s1548 = scalar_lea.vmem [#allocation2], %s1547
        %v1549 = vld [vmem:[%s1548] sm:$0xff]
        %v1550 = vld [vmem:[%s1548 + $0x8] sm:$0xff]
        %v1551 = vld [vmem:[%s1548 + $0x10] sm:$0xff]
        %v1552 = vld [vmem:[%s1548 + $0x18] sm:$0xff]
        %v1553 = vpack.c.bf16 %v1543, %v1543
        %1554 = vmatprep.subr.bf16.mxu0 %v892
        %1555 = vmatpush1.bf16.msra.mxu0 %v891
        %1556 = vmatprep.subr.bf16.mxu0 %v896
        %1557 = vmatpush1.bf16.msra.mxu0 %v895
        %1558 = vmatprep.subr.bf16.mxu0 %v900
        %1559 = vmatpush1.bf16.msra.mxu0 %v899
        %1560 = vmatprep.subr.bf16.mxu0 %v904
        %1561 = vmatpush1.bf16.msra.mxu0 %v903
        %1562 = vmatprep.subr.bf16.mxu0 %v908
        %1563 = vmatpush1.bf16.msra.mxu0 %v907
        %1564 = vmatprep.subr.bf16.mxu0 %v912
        %1565 = vmatpush1.bf16.msra.mxu0 %v911
        %1566 = vmatprep.subr.bf16.mxu0 %v916
        %1567 = vmatpush1.bf16.msra.mxu0 %v915
        %1568 = vmatprep.subr.bf16.mxu0 %v920
        %1569 = vmatpush1.bf16.msra.mxu0 %v919
        %1570 = vmatprep.subr.bf16.mxu0 0
        %1571 = vmatpush1.bf16.msra.mxu0 0
        %1572 = vmatprep.subr.bf16.mxu0 0
        %1573 = vmatpush1.bf16.msra.mxu0 0
        %1574 = vmatprep.subr.bf16.mxu0 0
        %1575 = vmatpush1.bf16.msra.mxu0 0
        %1576 = vmatprep.subr.bf16.mxu0 0
        %1577 = vmatpush1.bf16.msra.mxu0 0
        %1578 = vmatprep.subr.bf16.mxu0 0
        %1579 = vmatpush1.bf16.msra.mxu0 0
        %1580 = vmatprep.subr.bf16.mxu0 0
        %1581 = vmatpush1.bf16.msra.mxu0 0
        %1582 = vmatprep.subr.bf16.mxu0 0
        %1583 = vmatpush1.bf16.msra.mxu0 0
        %1584 = vmatprep.subr.bf16.mxu0 0
        %1585 = vmatpush1.bf16.msra.mxu0 0
        %1586 = vmatprep.mubr.bf16.mxu0 0
        %1587 = vmatmul.mubr.bf16.gmra.mrb[0].mxu0 %v1553
        %v1588 = vpop.f32.mrb[0].mxu0
        %v1589 = vadd.f32 0.0, %v1588
        %v1590 = vpop.f32.mrb[0].mxu0
        %v1591 = vadd.f32 0.0, %v1590
        %v1592 = vpop.f32.mrb[0].mxu0
        %v1593 = vpop.f32.mrb[0].mxu0
        %1594 = vdwg.mxu0
        %1595 = vmatprep.subr.bf16.mxu0 %v894
        %1596 = vmatpush1.bf16.msra.mxu0 %v893
        %1597 = vmatprep.subr.bf16.mxu0 %v898
        %1598 = vmatpush1.bf16.msra.mxu0 %v897
        %1599 = vmatprep.subr.bf16.mxu0 %v902
        %1600 = vmatpush1.bf16.msra.mxu0 %v901
        %1601 = vmatprep.subr.bf16.mxu0 %v906
        %1602 = vmatpush1.bf16.msra.mxu0 %v905
        %1603 = vmatprep.subr.bf16.mxu0 %v910
        %1604 = vmatpush1.bf16.msra.mxu0 %v909
        %1605 = vmatprep.subr.bf16.mxu0 %v914
        %1606 = vmatpush1.bf16.msra.mxu0 %v913
        %1607 = vmatprep.subr.bf16.mxu0 %v918
        %1608 = vmatpush1.bf16.msra.mxu0 %v917
        %1609 = vmatprep.subr.bf16.mxu0 %v922
        %1610 = vmatpush1.bf16.msra.mxu0 %v921
        %1611 = vmatprep.subr.bf16.mxu0 0
        %1612 = vmatpush1.bf16.msra.mxu0 0
        %1613 = vmatprep.subr.bf16.mxu0 0
        %1614 = vmatpush1.bf16.msra.mxu0 0
        %1615 = vmatprep.subr.bf16.mxu0 0
        %1616 = vmatpush1.bf16.msra.mxu0 0
        %1617 = vmatprep.subr.bf16.mxu0 0
        %1618 = vmatpush1.bf16.msra.mxu0 0
        %1619 = vmatprep.subr.bf16.mxu0 0
        %1620 = vmatpush1.bf16.msra.mxu0 0
        %1621 = vmatprep.subr.bf16.mxu0 0
        %1622 = vmatpush1.bf16.msra.mxu0 0
        %1623 = vmatprep.subr.bf16.mxu0 0
        %1624 = vmatpush1.bf16.msra.mxu0 0
        %1625 = vmatprep.subr.bf16.mxu0 0
        %1626 = vmatpush1.bf16.msra.mxu0 0
        %1627 = vmatprep.mubr.bf16.mxu0 0
        %1628 = vmatmul.mubr.bf16.gmra.mrb[0].mxu0 %v1553
        %v1629 = vpop.f32.mrb[0].mxu0
        %v1630 = vadd.f32 0.0, %v1629
        %v1631 = vpop.f32.mrb[0].mxu0
        %v1632 = vadd.f32 0.0, %v1631
        %v1633 = vpop.f32.mrb[0].mxu0
        %v1634 = vpop.f32.mrb[0].mxu0
        %1635 = vdwg.mxu0
        %v1636 = vadd.f32 %v1549, %v1589
        %v1637 = vadd.f32 %v1550, %v1591
        %v1638 = vadd.f32 %v1551, %v1630
        %v1639 = vadd.f32 %v1552, %v1632
        %v1640 = vxor.u32 %v1636, 2147483648
        %v1641 = vmul.f32 %v1640, 1.442695
        %v1642 = vpow.pop %v1641
        %v1643 = vadd.f32 %v1642, 1.0
        %v1644 = vrcp.pop %v1643
        %v1645 = vmul.f32 1.0, %v1644
        %v1646 = vxor.u32 %v1637, 2147483648
        %v1647 = vmul.f32 %v1646, 1.442695
        %v1648 = vpow.pop %v1647
        %v1649 = vadd.f32 %v1648, 1.0
        %v1650 = vrcp.pop %v1649
        %v1651 = vmul.f32 1.0, %v1650
        %v1652 = vtanh.pop %v1638
        %v1653 = vmul.f32 %v1651, %v1535
        %v1654 = vmul.f32 %v1645, %v1652
        %v1655 = vadd.f32 %v1653, %v1654
        %v1656 = vtanh.pop %v1655
        %v1657 = vxor.u32 %v1639, 2147483648
        %v1658 = vmul.f32 %v1657, 1.442695
        %v1659 = vpow.pop %v1658
        %v1660 = vadd.f32 %v1659, 1.0
        %v1661 = vrcp.pop %v1660
        %v1662 = vmul.f32 1.0, %v1661
        %v1663 = vmul.f32 %v1662, %v1656
        %s1664 = scalar_lea.vmem %s330, 40 [#allocation11]
        %1665 = vst [vmem:[%s1664] sm:$0xff] %v1663
        %s1666 = smul.u32 6, 4
        %s1667 = smul.addr %s1666, 8
        %s1668 = scalar_lea.vmem [#allocation2], %s1667
        %v1669 = vld [vmem:[%s1668] sm:$0xff]
        %v1670 = vld [vmem:[%s1668 + $0x8] sm:$0xff]
        %v1671 = vld [vmem:[%s1668 + $0x10] sm:$0xff]
        %v1672 = vld [vmem:[%s1668 + $0x18] sm:$0xff]
        %v1673 = vpack.c.bf16 %v1663, %v1663
        %1674 = vmatprep.subr.bf16.mxu0 %v892
        %1675 = vmatpush1.bf16.msra.mxu0 %v891
        %1676 = vmatprep.subr.bf16.mxu0 %v896
        %1677 = vmatpush1.bf16.msra.mxu0 %v895
        %1678 = vmatprep.subr.bf16.mxu0 %v900
        %1679 = vmatpush1.bf16.msra.mxu0 %v899
        %1680 = vmatprep.subr.bf16.mxu0 %v904
        %1681 = vmatpush1.bf16.msra.mxu0 %v903
        %1682 = vmatprep.subr.bf16.mxu0 %v908
        %1683 = vmatpush1.bf16.msra.mxu0 %v907
        %1684 = vmatprep.subr.bf16.mxu0 %v912
        %1685 = vmatpush1.bf16.msra.mxu0 %v911
        %1686 = vmatprep.subr.bf16.mxu0 %v916
        %1687 = vmatpush1.bf16.msra.mxu0 %v915
        %1688 = vmatprep.subr.bf16.mxu0 %v920
        %1689 = vmatpush1.bf16.msra.mxu0 %v919
        %1690 = vmatprep.subr.bf16.mxu0 0
        %1691 = vmatpush1.bf16.msra.mxu0 0
        %1692 = vmatprep.subr.bf16.mxu0 0
        %1693 = vmatpush1.bf16.msra.mxu0 0
        %1694 = vmatprep.subr.bf16.mxu0 0
        %1695 = vmatpush1.bf16.msra.mxu0 0
        %1696 = vmatprep.subr.bf16.mxu0 0
        %1697 = vmatpush1.bf16.msra.mxu0 0
        %1698 = vmatprep.subr.bf16.mxu0 0
        %1699 = vmatpush1.bf16.msra.mxu0 0
        %1700 = vmatprep.subr.bf16.mxu0 0
        %1701 = vmatpush1.bf16.msra.mxu0 0
        %1702 = vmatprep.subr.bf16.mxu0 0
        %1703 = vmatpush1.bf16.msra.mxu0 0
        %1704 = vmatprep.subr.bf16.mxu0 0
        %1705 = vmatpush1.bf16.msra.mxu0 0
        %1706 = vmatprep.mubr.bf16.mxu0 0
        %1707 = vmatmul.mubr.bf16.gmra.mrb[0].mxu0 %v1673
        %v1708 = vpop.f32.mrb[0].mxu0
        %v1709 = vadd.f32 0.0, %v1708
        %v1710 = vpop.f32.mrb[0].mxu0
        %v1711 = vadd.f32 0.0, %v1710
        %v1712 = vpop.f32.mrb[0].mxu0
        %v1713 = vpop.f32.mrb[0].mxu0
        %1714 = vdwg.mxu0
        %1715 = vmatprep.subr.bf16.mxu0 %v894
        %1716 = vmatpush1.bf16.msra.mxu0 %v893
        %1717 = vmatprep.subr.bf16.mxu0 %v898
        %1718 = vmatpush1.bf16.msra.mxu0 %v897
        %1719 = vmatprep.subr.bf16.mxu0 %v902
        %1720 = vmatpush1.bf16.msra.mxu0 %v901
        %1721 = vmatprep.subr.bf16.mxu0 %v906
        %1722 = vmatpush1.bf16.msra.mxu0 %v905
        %1723 = vmatprep.subr.bf16.mxu0 %v910
        %1724 = vmatpush1.bf16.msra.mxu0 %v909
        %1725 = vmatprep.subr.bf16.mxu0 %v914
        %1726 = vmatpush1.bf16.msra.mxu0 %v913
        %1727 = vmatprep.subr.bf16.mxu0 %v918
        %1728 = vmatpush1.bf16.msra.mxu0 %v917
        %1729 = vmatprep.subr.bf16.mxu0 %v922
        %1730 = vmatpush1.bf16.msra.mxu0 %v921
        %1731 = vmatprep.subr.bf16.mxu0 0
        %1732 = vmatpush1.bf16.msra.mxu0 0
        %1733 = vmatprep.subr.bf16.mxu0 0
        %1734 = vmatpush1.bf16.msra.mxu0 0
        %1735 = vmatprep.subr.bf16.mxu0 0
        %1736 = vmatpush1.bf16.msra.mxu0 0
        %1737 = vmatprep.subr.bf16.mxu0 0
        %1738 = vmatpush1.bf16.msra.mxu0 0
        %1739 = vmatprep.subr.bf16.mxu0 0
        %1740 = vmatpush1.bf16.msra.mxu0 0
        %1741 = vmatprep.subr.bf16.mxu0 0
        %1742 = vmatpush1.bf16.msra.mxu0 0
        %1743 = vmatprep.subr.bf16.mxu0 0
        %1744 = vmatpush1.bf16.msra.mxu0 0
        %1745 = vmatprep.subr.bf16.mxu0 0
        %1746 = vmatpush1.bf16.msra.mxu0 0
        %1747 = vmatprep.mubr.bf16.mxu0 0
        %1748 = vmatmul.mubr.bf16.gmra.mrb[0].mxu0 %v1673
        %v1749 = vpop.f32.mrb[0].mxu0
        %v1750 = vadd.f32 0.0, %v1749
        %v1751 = vpop.f32.mrb[0].mxu0
        %v1752 = vadd.f32 0.0, %v1751
        %v1753 = vpop.f32.mrb[0].mxu0
        %v1754 = vpop.f32.mrb[0].mxu0
        %1755 = vdwg.mxu0
        %v1756 = vadd.f32 %v1669, %v1709
        %v1757 = vadd.f32 %v1670, %v1711
        %v1758 = vadd.f32 %v1671, %v1750
        %v1759 = vadd.f32 %v1672, %v1752
        %v1760 = vxor.u32 %v1756, 2147483648
        %v1761 = vmul.f32 %v1760, 1.442695
        %v1762 = vpow.pop %v1761
        %v1763 = vadd.f32 %v1762, 1.0
        %v1764 = vrcp.pop %v1763
        %v1765 = vmul.f32 1.0, %v1764
        %v1766 = vxor.u32 %v1757, 2147483648
        %v1767 = vmul.f32 %v1766, 1.442695
        %v1768 = vpow.pop %v1767
        %v1769 = vadd.f32 %v1768, 1.0
        %v1770 = vrcp.pop %v1769
        %v1771 = vmul.f32 1.0, %v1770
        %v1772 = vtanh.pop %v1758
        %v1773 = vmul.f32 %v1771, %v1655
        %v1774 = vmul.f32 %v1765, %v1772
        %v1775 = vadd.f32 %v1773, %v1774
        %v1776 = vtanh.pop %v1775
        %v1777 = vxor.u32 %v1759, 2147483648
        %v1778 = vmul.f32 %v1777, 1.442695
        %v1779 = vpow.pop %v1778
        %v1780 = vadd.f32 %v1779, 1.0
        %v1781 = vrcp.pop %v1780
        %v1782 = vmul.f32 1.0, %v1781
        %v1783 = vmul.f32 %v1782, %v1776
        %s1784 = scalar_lea.vmem %s330, 48 [#allocation11]
        %1785 = vst [vmem:[%s1784] sm:$0xff] %v1783
        %s1786 = smul.u32 7, 4
        %s1787 = smul.addr %s1786, 8
        %s1788 = scalar_lea.vmem [#allocation2], %s1787
        %v1789 = vld [vmem:[%s1788] sm:$0xff]
        %v1790 = vld [vmem:[%s1788 + $0x8] sm:$0xff]
        %v1791 = vld [vmem:[%s1788 + $0x10] sm:$0xff]
        %v1792 = vld [vmem:[%s1788 + $0x18] sm:$0xff]
        %v1793 = vpack.c.bf16 %v1783, %v1783
        %1794 = vmatprep.subr.bf16.mxu0 %v892
        %1795 = vmatpush1.bf16.msra.mxu0 %v891
        %1796 = vmatprep.subr.bf16.mxu0 %v896
        %1797 = vmatpush1.bf16.msra.mxu0 %v895
        %1798 = vmatprep.subr.bf16.mxu0 %v900
        %1799 = vmatpush1.bf16.msra.mxu0 %v899
        %1800 = vmatprep.subr.bf16.mxu0 %v904
        %1801 = vmatpush1.bf16.msra.mxu0 %v903
        %1802 = vmatprep.subr.bf16.mxu0 %v908
        %1803 = vmatpush1.bf16.msra.mxu0 %v907
        %1804 = vmatprep.subr.bf16.mxu0 %v912
        %1805 = vmatpush1.bf16.msra.mxu0 %v911
        %1806 = vmatprep.subr.bf16.mxu0 %v916
        %1807 = vmatpush1.bf16.msra.mxu0 %v915
        %1808 = vmatprep.subr.bf16.mxu0 %v920
        %1809 = vmatpush1.bf16.msra.mxu0 %v919
        %1810 = vmatprep.subr.bf16.mxu0 0
        %1811 = vmatpush1.bf16.msra.mxu0 0
        %1812 = vmatprep.subr.bf16.mxu0 0
        %1813 = vmatpush1.bf16.msra.mxu0 0
        %1814 = vmatprep.subr.bf16.mxu0 0
        %1815 = vmatpush1.bf16.msra.mxu0 0
        %1816 = vmatprep.subr.bf16.mxu0 0
        %1817 = vmatpush1.bf16.msra.mxu0 0
        %1818 = vmatprep.subr.bf16.mxu0 0
        %1819 = vmatpush1.bf16.msra.mxu0 0
        %1820 = vmatprep.subr.bf16.mxu0 0
        %1821 = vmatpush1.bf16.msra.mxu0 0
        %1822 = vmatprep.subr.bf16.mxu0 0
        %1823 = vmatpush1.bf16.msra.mxu0 0
        %1824 = vmatprep.subr.bf16.mxu0 0
        %1825 = vmatpush1.bf16.msra.mxu0 0
        %1826 = vmatprep.mubr.bf16.mxu0 0
        %1827 = vmatmul.mubr.bf16.gmra.mrb[0].mxu0 %v1793
        %v1828 = vpop.f32.mrb[0].mxu0
        %v1829 = vadd.f32 0.0, %v1828
        %v1830 = vpop.f32.mrb[0].mxu0
        %v1831 = vadd.f32 0.0, %v1830
        %v1832 = vpop.f32.mrb[0].mxu0
        %v1833 = vpop.f32.mrb[0].mxu0
        %1834 = vdwg.mxu0
        %1835 = vmatprep.subr.bf16.mxu0 %v894
        %1836 = vmatpush1.bf16.msra.mxu0 %v893
        %1837 = vmatprep.subr.bf16.mxu0 %v898
        %1838 = vmatpush1.bf16.msra.mxu0 %v897
        %1839 = vmatprep.subr.bf16.mxu0 %v902
        %1840 = vmatpush1.bf16.msra.mxu0 %v901
        %1841 = vmatprep.subr.bf16.mxu0 %v906
        %1842 = vmatpush1.bf16.msra.mxu0 %v905
        %1843 = vmatprep.subr.bf16.mxu0 %v910
        %1844 = vmatpush1.bf16.msra.mxu0 %v909
        %1845 = vmatprep.subr.bf16.mxu0 %v914
        %1846 = vmatpush1.bf16.msra.mxu0 %v913
        %1847 = vmatprep.subr.bf16.mxu0 %v918
        %1848 = vmatpush1.bf16.msra.mxu0 %v917
        %1849 = vmatprep.subr.bf16.mxu0 %v922
        %1850 = vmatpush1.bf16.msra.mxu0 %v921
        %1851 = vmatprep.subr.bf16.mxu0 0
        %1852 = vmatpush1.bf16.msra.mxu0 0
        %1853 = vmatprep.subr.bf16.mxu0 0
        %1854 = vmatpush1.bf16.msra.mxu0 0
        %1855 = vmatprep.subr.bf16.mxu0 0
        %1856 = vmatpush1.bf16.msra.mxu0 0
        %1857 = vmatprep.subr.bf16.mxu0 0
        %1858 = vmatpush1.bf16.msra.mxu0 0
        %1859 = vmatprep.subr.bf16.mxu0 0
        %1860 = vmatpush1.bf16.msra.mxu0 0
        %1861 = vmatprep.subr.bf16.mxu0 0
        %1862 = vmatpush1.bf16.msra.mxu0 0
        %1863 = vmatprep.subr.bf16.mxu0 0
        %1864 = vmatpush1.bf16.msra.mxu0 0
        %1865 = vmatprep.subr.bf16.mxu0 0
        %1866 = vmatpush1.bf16.msra.mxu0 0
        %1867 = vmatprep.mubr.bf16.mxu0 0
        %1868 = vmatmul.mubr.bf16.gmra.mrb[0].mxu0 %v1793
        %v1869 = vpop.f32.mrb[0].mxu0
        %v1870 = vadd.f32 0.0, %v1869
        %v1871 = vpop.f32.mrb[0].mxu0
        %v1872 = vadd.f32 0.0, %v1871
        %v1873 = vpop.f32.mrb[0].mxu0
        %v1874 = vpop.f32.mrb[0].mxu0
        %1875 = vdwg.mxu0
        %v1876 = vadd.f32 %v1789, %v1829
        %v1877 = vadd.f32 %v1790, %v1831
        %v1878 = vadd.f32 %v1791, %v1870
        %v1879 = vadd.f32 %v1792, %v1872
        %v1880 = vxor.u32 %v1876, 2147483648
        %v1881 = vmul.f32 %v1880, 1.442695
        %v1882 = vpow.pop %v1881
        %v1883 = vadd.f32 %v1882, 1.0
        %v1884 = vrcp.pop %v1883
        %v1885 = vmul.f32 1.0, %v1884
        %v1886 = vxor.u32 %v1877, 2147483648
        %v1887 = vmul.f32 %v1886, 1.442695
        %v1888 = vpow.pop %v1887
        %v1889 = vadd.f32 %v1888, 1.0
        %v1890 = vrcp.pop %v1889
        %v1891 = vmul.f32 1.0, %v1890
        %v1892 = vtanh.pop %v1878
        %v1893 = vmul.f32 %v1891, %v1775
        %v1894 = vmul.f32 %v1885, %v1892
        %v1895 = vadd.f32 %v1893, %v1894
        %v1896 = vtanh.pop %v1895
        %v1897 = vxor.u32 %v1879, 2147483648
        %v1898 = vmul.f32 %v1897, 1.442695
        %v1899 = vpow.pop %v1898
        %v1900 = vadd.f32 %v1899, 1.0
        %v1901 = vrcp.pop %v1900
        %v1902 = vmul.f32 1.0, %v1901
        %v1903 = vmul.f32 %v1902, %v1896
        %s1904 = scalar_lea.vmem %s330, 56 [#allocation11]
        %1905 = vst [vmem:[%s1904] sm:$0xff] %v1903
        %s1906 = sand.u32 %s139, 1
        %s1907 = scalar_lea.sflag [#allocation5], %s1906
        %s1908 = sand.u32 %s139, 1
        %s1909 = smul.addr %s1908, 64
        %s1910 = scalar_lea.vmem [#allocation11], %s1909
        // Predicated region
        $region53: #{tpu_custom_call.1} parent=35 // pred_check
          %p1911 = pneg %p149
        $region54: #{tpu_custom_call.1} parent=35 // pred_check_branch
          %1913 = sbr.rel (%p1911) target = $region56
        $region55: #{tpu_custom_call.1} parent=35 // pred_region
          %s1915 = ssub.s32 1024, 1024
          %1916 = vsyncadd %s1907, %s1915
          %s1917 = smul.addr %s27, 8
          %s1918 = smul.addr %s1917, 128
          %s1919 = scalar_lea.hbm %s4, %s1918
          %s1920 = sshll.u32 %s1910, 4
          %s1921 = int_to_ptr.vmem [resolvable:$true] %s1920
          %1926 = dma.vmem_to_hbm [thread:$0]  %s1921, 1024, %s1919, %s1907, 128, 128, 8
        $region56: #{tpu_custom_call.1} parent=35 // pred_fallthru
          _
      $region36: #{tpu_custom_call.1} parent=5 // pred_fallthru
        _
      %p1927 = scmp.le.s32.totalorder 2, %s22
      // Predicated region
      $region57: #{tpu_custom_call.1} parent=5 // pred_check
        %p1928 = pneg %p1927
      $region58: #{tpu_custom_call.1} parent=5 // pred_check_branch
        %1930 = sbr.rel (%p1928) target = $region60
      $region59: #{tpu_custom_call.1} parent=5 // pred_region
        %s1931 = ssub.s32 %s22, 2
        // Predicated region
        $region61: #{tpu_custom_call.1} parent=59 // pred_check
          %p1932 = pneg %p155
        $region62: #{tpu_custom_call.1} parent=59 // pred_check_branch
          %1934 = sbr.rel (%p1932) target = $region64
        $region63: #{tpu_custom_call.1} parent=59 // pred_region
          %s1935 = sand.u32 %s140, 1
          %s1936 = scalar_lea.sflag [#allocation5], %s1935
          %s1937 = sand.u32 %s140, 1
          %s1938 = smul.addr %s1937, 64
          %s1939 = scalar_lea.vmem [#allocation11], %s1938
          %1940 = dma.done %s1936, 1024
        $region64: #{tpu_custom_call.1} parent=59 // pred_fallthru
          _
      $region60: #{tpu_custom_call.1} parent=5 // pred_fallthru
        _
    $region6: #{tpu_custom_call.1} parent=1 // loop_footer
      %s26 = sadd.s32 1, %s22
    $region7: #{tpu_custom_call.1} parent=1 // loop_footer_branch
      %21 = sbr.rel target = $region3
    $region8: #{tpu_custom_call.1} parent=1 // loop_exit
      _
    %1941 = vsyncpa [#allocation4], 1
    %s1942 = scalar_lea.sflag [#allocation4], 1
    %1943 = vsyncpa %s1942, 1
    %1944 = vsyncpa [#allocation7], 1
    %s1945 = scalar_lea.sflag [#allocation7], 1
    %1946 = vsyncpa %s1945, 1
    %1947 = vsyncpa [#allocation10], 1
    %s1948 = scalar_lea.sflag [#allocation10], 1
    %1949 = vsyncpa %s1948, 1
    %1950 = vsyncpa [#allocation5], 1
    %s1951 = scalar_lea.sflag [#allocation5], 1
    %1952 = vsyncpa %s1951, 1

</llo_original>
